<compile_context>
chip_gen: v6e
topology: v6e:2x2x1
jax: 0.10.0
libtpu: 0.0.40
codegen_flags: <defaults>
</compile_context>

<pallas_src>
import functools
import math

import jax
import jax.numpy as jnp
import numpy as np
from jax import lax
from jax.experimental import pallas as pl
from jax.experimental.pallas import tpu as pltpu


# ----------------------------- kernel helpers ------------------------------

def _layernorm(x, gamma, eps=1e-5):
    # F.layer_norm over last dim, beta == 0 (bias-less LayerNorm in reference).
    mu = jnp.mean(x, axis=-1, keepdims=True)
    var = jnp.mean((x - mu) ** 2, axis=-1, keepdims=True)
    return (x - mu) * lax.rsqrt(var + eps) * gamma


def _gelu_exact(x):
    # PyTorch nn.GELU default is the exact erf formulation (kept exact to match
    # the reference; tanh approx would move this to the EUP on v5e).
    return 0.5 * x * (1.0 + lax.erf(x * (1.0 / math.sqrt(2.0))))


def _vmem_limit_bytes():
    # Per-generation VMEM budget with headroom for compiler scratch.
    try:
        cap = int(pltpu.get_tpu_info().vmem_capacity_bytes)
    except Exception:
        cap = 128 * 1024 * 1024
    return min(cap * 7 // 8, 128 * 1024 * 1024)


# ------------------------- depth-loop fused kernel ---------------------------
# grid = (depth,).  Each grid step applies one DecTransformerLayer to the
# VMEM-resident activation; the last step also applies final_norm and writes
# the (B*N, D) hidden state out (the logits matmul lives in a separate,
# vocab-parallel kernel).

def _layers_kernel(heads, batch, seq,
                   x_ref, mask_ref, g1_ref, wq_ref, wk_ref, wv_ref, wo_ref,
                   g2_ref, w1_ref, b1_ref, w2_ref, b2_ref, gf_ref,
                   h_out_ref, x_scr):
    l = pl.program_id(0)

    @pl.when(l == 0)
    def _():
        x_scr[...] = x_ref[...]                      # load embeddings once

    x = x_scr[...]                                   # (B*N, D) float32
    BN, D = x.shape
    H, B, N = heads, batch, seq
    Dh = D // H

    # ---------------- norm1 ----------------
    xn = _layernorm(x, g1_ref[0])

    # -------- attention: full-width projections on the MXU --------
    xb = xn.astype(jnp.bfloat16)
    q = jnp.dot(xb, wq_ref[0], preferred_element_type=jnp.float32)   # (BN, D)
    k = jnp.dot(xb, wk_ref[0], preferred_element_type=jnp.float32)
    v = jnp.dot(xb, wv_ref[0], preferred_element_type=jnp.float32)

    # Causal mask is precomputed in the wrapper (1.0 = attend); broadcast once
    # per layer, outside the head loop.
    allowed = jnp.broadcast_to(mask_ref[...] > 0.0, (B, N, N))
    neg = jnp.float32(-jnp.finfo(jnp.float32).max)
    scale = jnp.float32(Dh ** -0.5)

    # Per-head scores/softmax on per-batch (N, N) blocks; the O-projection is
    # fused into the loop and accumulated into a lane-dense (BN, D) slab.
    attn_out = jnp.zeros((BN, D), jnp.float32)
    for h in range(H):
        sl = slice(h * Dh, (h + 1) * Dh)
        qh = q[:, sl].reshape(B, N, Dh).astype(jnp.bfloat16)
        kh = k[:, sl].reshape(B, N, Dh).astype(jnp.bfloat16)
        vh = v[:, sl].reshape(B, N, Dh).astype(jnp.bfloat16)

        s = jnp.einsum('bqd,bkd->bqk', qh, kh,
                       preferred_element_type=jnp.float32) * scale   # (B, N, N)
        # Diagonal is always allowed -> no fully-masked row -> exp() row sums
        # are never zero.
        s = jnp.where(allowed, s, neg)
        s = s - jnp.max(s, axis=-1, keepdims=True)
        p = jnp.exp(s)
        p = p * pl.reciprocal(jnp.sum(p, axis=-1, keepdims=True), approx=True)

        ctx = jnp.einsum('bqk,bkd->bqd', p.astype(jnp.bfloat16), vh,
                         preferred_element_type=jnp.float32)          # (B, N, Dh)
        attn_out = attn_out + jnp.dot(
            ctx.reshape(BN, Dh).astype(jnp.bfloat16), wo_ref[0, sl, :],
            preferred_element_type=jnp.float32)

    # ---------------- norm2 + feed-forward ----------------
    y = _layernorm(attn_out, g2_ref[0])
    h1 = jnp.dot(y.astype(jnp.bfloat16), w1_ref[0],
                 preferred_element_type=jnp.float32) + b1_ref[0]
    h1 = _gelu_exact(h1)
    y2 = jnp.dot(h1.astype(jnp.bfloat16), w2_ref[0],
                 preferred_element_type=jnp.float32) + b2_ref[0]

    x_scr[...] = y2                                  # stays in VMEM for next layer

    # Constant-index output block: written only on the last step and kept
    # resident across the depth loop (current Pallas revisiting semantics).
    @pl.when(l == pl.num_programs(0) - 1)
    def _():
        h_out_ref[...] = _layernorm(y2, gf_ref[...])


# ------------------- vocab-tiled final logits projection --------------------

def _logits_kernel(h_ref, wl_ref, out_ref):
    out_ref[...] = jnp.dot(h_ref[...].astype(jnp.bfloat16), wl_ref[...],
                           preferred_element_type=jnp.float32)


def dec_transformer_forward(params, token_ids, heads):
    """DecTransformer.forward (eval mode, no cache, no intermediates)."""
    B, N = token_ids.shape
    D = params["token_emb"].shape[1]
    L = params["layers"]
    depth, _, Dff = L["w1"].shape
    V = params["w_logits"].shape[1]
    BN = B * N

    # Embedding gather + scaled positional embedding kept as JAX glue.
    tok = jnp.take(params["token_emb"], token_ids, axis=0)           # (B, N, D)
    pos = params["pos_emb"][:N] * (D ** -0.5)                        # (N, D)
    x = (tok + pos[None]).reshape(BN, D)                             # lane-dense slab
    # emb_dropout / attn_dropout / ff_dropout are identity in eval mode.

    # Causal mask hoisted out of the kernel (1.0 = attend, 0.0 = masked).
    causal = jnp.tril(jnp.ones((N, N), jnp.float32))

    vmem_limit = _vmem_limit_bytes()

    h_final = pl.pallas_call(
        functools.partial(_layers_kernel, heads, B, N),
        out_shape=jax.ShapeDtypeStruct((BN, D), jnp.float32),
        grid=(depth,),
        in_specs=[
            pl.BlockSpec((BN, D), lambda l: (0, 0)),          # x (resident)
            pl.BlockSpec((N, N), lambda l: (0, 0)),           # causal mask
            pl.BlockSpec((1, 1, D), lambda l: (l, 0, 0)),     # gamma1
            pl.BlockSpec((1, D, D), lambda l: (l, 0, 0)),     # wq
            pl.BlockSpec((1, D, D), lambda l: (l, 0, 0)),     # wk
            pl.BlockSpec((1, D, D), lambda l: (l, 0, 0)),     # wv
            pl.BlockSpec((1, D, D), lambda l: (l, 0, 0)),     # wo
            pl.BlockSpec((1, 1, D), lambda l: (l, 0, 0)),     # gamma2
            pl.BlockSpec((1, D, Dff), lambda l: (l, 0, 0)),   # ff w1
            pl.BlockSpec((1, 1, Dff), lambda l: (l, 0, 0)),   # ff b1
            pl.BlockSpec((1, Dff, D), lambda l: (l, 0, 0)),   # ff w2
            pl.BlockSpec((1, 1, D), lambda l: (l, 0, 0)),     # ff b2
            pl.BlockSpec((1, D), lambda l: (0, 0)),           # final gamma
        ],
        out_specs=pl.BlockSpec((BN, D), lambda l: (0, 0)),
        scratch_shapes=[pltpu.VMEM((BN, D), jnp.float32)],    # resident activation
        compiler_params=pltpu.CompilerParams(
            dimension_semantics=("arbitrary",),               # depth is sequential
            vmem_limit_bytes=vmem_limit),
    )(x, causal, L["g1"], L["wq"], L["wk"], L["wv"], L["wo"],
      L["g2"], L["w1"], L["b1"], L["w2"], L["b2"], params["final_gamma"])

    # Vocab-tiled logits projection, out of the depth loop; the grid axis is
    # "parallel" so v7x can split vocab tiles across its two TensorCores.
    TV = V if V <= 512 else 512
    logits = pl.pallas_call(
        _logits_kernel,
        out_shape=jax.ShapeDtypeStruct((BN, V), jnp.float32),
        grid=(pl.cdiv(V, TV),),
        in_specs=[
            pl.BlockSpec((BN, D), lambda j: (0, 0)),          # final hidden
            pl.BlockSpec((D, TV), lambda j: (0, j)),          # logits weight tile
        ],
        out_specs=pl.BlockSpec((BN, TV), lambda j: (0, j)),   # lane-dense slab
        compiler_params=pltpu.CompilerParams(
            dimension_semantics=("parallel",),
            vmem_limit_bytes=vmem_limit),
    )(h_final, params["w_logits"])

    return logits.reshape(B, N, V)


# ------------------------------ parameter init --------------------------------

def init_params(key, dim, depth, num_tokens, max_seq_len, ff_inner_dim):
    keys = jax.random.split(key, 11)
    f32, bf16 = jnp.float32, jnp.bfloat16
    s = dim ** -0.5

    def w(k, shape, scale):
        return (jax.random.normal(k, shape, f32) * scale).astype(bf16)

    return {
        # kaiming_normal_-style scale for the token embedding
        "token_emb": jax.random.normal(keys[0], (num_tokens, dim), f32)
                     * (2.0 / dim) ** 0.5,
        "pos_emb": jax.random.normal(keys[1], (max_seq_len, dim), f32) * 0.02,
        "final_gamma": jnp.ones((1, dim), f32),
        "w_logits": w(keys[2], (dim, num_tokens), s),
        "layers": dict(                                   # stacked [depth, ...]
            g1=jnp.ones((depth, 1, dim), f32),
            g2=jnp.ones((depth, 1, dim), f32),
            wq=w(keys[3], (depth, dim, dim), s),
            wk=w(keys[4], (depth, dim, dim), s),
            wv=w(keys[5], (depth, dim, dim), s),
            wo=w(keys[6], (depth, dim, dim), s),
            w1=w(keys[7], (depth, dim, ff_inner_dim), s),
            b1=jax.random.normal(keys[8], (depth, 1, ff_inner_dim), f32) * 0.01,
            w2=w(keys[9], (depth, ff_inner_dim, dim), ff_inner_dim ** -0.5),
            b2=jax.random.normal(keys[10], (depth, 1, dim), f32) * 0.01,
        ),
    }


# ------------------------- pure-JAX reference check --------------------------
# Matched-precision reference: same bf16 weight values and bf16 quantization of
# matmul operands as the kernel (f32 accumulation), f32 element-wise math.

def _ref_layernorm(x, gamma, eps=1e-5):
    mu = x.mean(-1, keepdims=True)
    var = ((x - mu) ** 2).mean(-1, keepdims=True)
    return (x - mu) / jnp.sqrt(var + eps) * gamma


def reference_forward(params, ids, heads):
    f32 = jnp.float32
    bfq = lambda t: t.astype(jnp.bfloat16).astype(f32)   # quantize matmul operands
    D = params["token_emb"].shape[1]
    B, N = ids.shape
    L = params["layers"]
    depth = L["wq"].shape[0]

    x = (jnp.take(params["token_emb"], ids, axis=0)
         + (params["pos_emb"][:N] * D ** -0.5)[None])
    for l in range(depth):
        wq, wk, wv, wo = (L[k][l].astype(f32) for k in ("wq", "wk", "wv", "wo"))
        w1, w2 = L["w1"][l].astype(f32), L["w2"][l].astype(f32)
        b1, b2 = L["b1"][l], L["b2"][l]

        xn = _ref_layernorm(x, L["g1"][l].reshape(-1))
        q = bfq(xn) @ wq
        k = bfq(xn) @ wk
        v = bfq(xn) @ wv

        def split(t):
            return t.reshape(B, N, heads, -1).transpose(0, 2, 1, 3)

        q, k, v = split(q), split(k), split(v)
        dh = q.shape[-1]
        dots = jnp.einsum("bhid,bhjd->bhij", bfq(q), bfq(k)) * dh ** -0.5
        mask = jnp.triu(jnp.ones((N, N), bool), k=1)
        dots = jnp.where(mask, -jnp.finfo(f32).max, dots)
        dots = dots - dots.max(-1, keepdims=True)
        attn = jnp.exp(dots)
        attn = attn / attn.sum(-1, keepdims=True)
        out = jnp.einsum("bhij,bhjd->bhid", bfq(attn), bfq(v))
        out = out.transpose(0, 2, 1, 3).reshape(B, N, D)
        out = bfq(out) @ wo

        y = _ref_layernorm(out, L["g2"][l].reshape(-1))
        h1 = bfq(y) @ w1 + b1
        h1 = 0.5 * h1 * (1.0 + jax.scipy.special.erf(h1 / jnp.sqrt(2.0)))
        x = bfq(h1) @ w2 + b2

    xn = _ref_layernorm(x, params["final_gamma"].reshape(-1))
    return bfq(xn) @ params["w_logits"].astype(f32)


# ----------------------------------- main ------------------------------------

if __name__ == "__main__":
    dim, depth, heads = 32, 2, 4
    num_tokens, max_seq_len = 64, 16
    ff_inner_dim = 64
    B, N = 2, 8

    key = jax.random.PRNGKey(0)
    pkey, ikey = jax.random.split(key)
    params = init_params(pkey, dim, depth, num_tokens, max_seq_len, ff_inner_dim)
    token_ids = jax.random.randint(ikey, (B, N), 0, num_tokens, dtype=jnp.int32)

    logits = jax.block_until_ready(dec_transformer_forward(params, token_ids, heads))
    ref = jax.block_until_ready(reference_forward(params, token_ids, heads))

    assert logits.shape == (B, N, num_tokens)
    np.testing.assert_allclose(np.asarray(logits), np.asarray(ref),
                               rtol=2e-2, atol=2e-2)
    print("KERNEL_OK")
</pallas_src>

<mosaic_0001>
module attributes {stable_mosaic.version = 11 : i64} {
  func.func @_layers_kernel(%arg0: i32, %arg1: memref<16x32xf32, #tpu.memory_space<vmem>>, %arg2: memref<8x8xf32, #tpu.memory_space<vmem>>, %arg3: memref<1x1x32xf32, #tpu.memory_space<vmem>>, %arg4: memref<1x32x32xbf16, #tpu.memory_space<vmem>>, %arg5: memref<1x32x32xbf16, #tpu.memory_space<vmem>>, %arg6: memref<1x32x32xbf16, #tpu.memory_space<vmem>>, %arg7: memref<1x32x32xbf16, #tpu.memory_space<vmem>>, %arg8: memref<1x1x32xf32, #tpu.memory_space<vmem>>, %arg9: memref<1x32x64xbf16, #tpu.memory_space<vmem>>, %arg10: memref<1x1x64xf32, #tpu.memory_space<vmem>>, %arg11: memref<1x64x32xbf16, #tpu.memory_space<vmem>>, %arg12: memref<1x1x32xf32, #tpu.memory_space<vmem>>, %arg13: memref<1x32xf32, #tpu.memory_space<vmem>>, %arg14: memref<16x32xf32, #tpu.memory_space<vmem>>, %arg15: memref<16x32xf32, #tpu.memory_space<vmem>>) attributes {dimension_semantics = [#tpu.dimension_semantics<arbitrary>], iteration_bounds = array<i64: 2>, scalar_prefetch = 0 : i64, scratch_operands = 1 : i64, tpu.core_type = #tpu.core_type<tc>, window_params = [{pipeline_mode = #tpu.pipeline_mode<synchronous>, transform_indices = @transform_0, window_bounds = array<i64: 16, 32>}, {pipeline_mode = #tpu.pipeline_mode<synchronous>, transform_indices = @transform_1, window_bounds = array<i64: 8, 8>}, {transform_indices = @transform_2, window_bounds = array<i64: 1, 1, 32>}, {transform_indices = @transform_3, window_bounds = array<i64: 1, 32, 32>}, {transform_indices = @transform_4, window_bounds = array<i64: 1, 32, 32>}, {transform_indices = @transform_5, window_bounds = array<i64: 1, 32, 32>}, {transform_indices = @transform_6, window_bounds = array<i64: 1, 32, 32>}, {transform_indices = @transform_7, window_bounds = array<i64: 1, 1, 32>}, {transform_indices = @transform_8, window_bounds = array<i64: 1, 32, 64>}, {transform_indices = @transform_9, window_bounds = array<i64: 1, 1, 64>}, {transform_indices = @transform_10, window_bounds = array<i64: 1, 64, 32>}, {transform_indices = @transform_11, window_bounds = array<i64: 1, 1, 32>}, {pipeline_mode = #tpu.pipeline_mode<synchronous>, transform_indices = @transform_12, window_bounds = array<i64: 1, 32>}, {pipeline_mode = #tpu.pipeline_mode<synchronous>, transform_indices = @transform_13, window_bounds = array<i64: 16, 32>}]} {
    %c0_i32 = arith.constant 0 : i32
    %0 = arith.cmpi eq, %arg0, %c0_i32 : i32
    %1 = arith.extui %0 : i1 to i32
    %c0_i32_0 = arith.constant 0 : i32
    %2 = arith.cmpi ne, %1, %c0_i32_0 : i32
    scf.if %2 {
      %c0_90 = arith.constant 0 : index
      %c0_91 = arith.constant 0 : index
      %220 = vector.load %arg1[%c0_90, %c0_91] : memref<16x32xf32, #tpu.memory_space<vmem>>, vector<16x32xf32>
      %c0_92 = arith.constant 0 : index
      %c0_93 = arith.constant 0 : index
      %221 = vector.load %arg15[%c0_92, %c0_93] : memref<16x32xf32, #tpu.memory_space<vmem>>, vector<16x32xf32>
      tpu.vector_store %arg15[%c0_92, %c0_93], %220 {strides = array<i32>} : memref<16x32xf32, #tpu.memory_space<vmem>>, vector<16x32xf32>,
    } else {
    }
    %c0 = arith.constant 0 : index
    %c0_1 = arith.constant 0 : index
    %3 = vector.load %arg15[%c0, %c0_1] : memref<16x32xf32, #tpu.memory_space<vmem>>, vector<16x32xf32>
    %c0_2 = arith.constant 0 : index
    %c0_3 = arith.constant 0 : index
    %c0_4 = arith.constant 0 : index
    %4 = vector.load %arg3[%c0_2, %c0_3, %c0_4] : memref<1x1x32xf32, #tpu.memory_space<vmem>>, vector<1x1x32xf32>
    %5 = vector.shape_cast %4 : vector<1x1x32xf32> to vector<1x32xf32>
    %cst = arith.constant dense<0.000000e+00> : vector<16xf32>
    %6 = vector.multi_reduction <add>, %3, %cst [1] : vector<16x32xf32> to vector<16xf32>
    %7 = vector.shape_cast %6 : vector<16xf32> to vector<16x1xf32>
    %cst_5 = arith.constant 3.200000e+01 : f32
    %8 = vector.broadcast %cst_5 : f32 to vector<16x1xf32>
    %9 = arith.divf %7, %8 : vector<16x1xf32>
    %10 = vector.broadcast %9 : vector<16x1xf32> to vector<16x32xf32>
    %11 = arith.subf %3, %10 : vector<16x32xf32>
    %12 = arith.mulf %11, %11 : vector<16x32xf32>
    %cst_6 = arith.constant dense<0.000000e+00> : vector<16xf32>
    %13 = vector.multi_reduction <add>, %12, %cst_6 [1] : vector<16x32xf32> to vector<16xf32>
    %14 = vector.shape_cast %13 : vector<16xf32> to vector<16x1xf32>
    %cst_7 = arith.constant 3.200000e+01 : f32
    %15 = vector.broadcast %cst_7 : f32 to vector<16x1xf32>
    %16 = arith.divf %14, %15 : vector<16x1xf32>
    %17 = vector.broadcast %9 : vector<16x1xf32> to vector<16x32xf32>
    %18 = arith.subf %3, %17 : vector<16x32xf32>
    %cst_8 = arith.constant 9.99999974E-6 : f32
    %19 = vector.broadcast %cst_8 : f32 to vector<16x1xf32>
    %20 = arith.addf %16, %19 : vector<16x1xf32>
    %21 = math.rsqrt %20 : vector<16x1xf32>
    %22 = vector.broadcast %21 : vector<16x1xf32> to vector<16x32xf32>
    %23 = arith.mulf %18, %22 : vector<16x32xf32>
    %24 = vector.broadcast %5 : vector<1x32xf32> to vector<16x32xf32>
    %25 = arith.mulf %23, %24 : vector<16x32xf32>
    %26 = arith.truncf %25 : vector<16x32xf32> to vector<16x32xbf16>
    %c0_9 = arith.constant 0 : index
    %c0_10 = arith.constant 0 : index
    %c0_11 = arith.constant 0 : index
    %27 = vector.load %arg4[%c0_9, %c0_10, %c0_11] : memref<1x32x32xbf16, #tpu.memory_space<vmem>>, vector<1x32x32xbf16>
    %28 = vector.shape_cast %27 : vector<1x32x32xbf16> to vector<32x32xbf16>
    %cst_12 = arith.constant dense<0.000000e+00> : vector<16x32xf32>
    %29 = tpu.matmul %26, %28, %cst_12 {dimension_numbers = #tpu.dot_dimension_numbers<[1], [0], [0], [1], [0, 0, 1, 1], [], []>} : vector<16x32xbf16>, vector<32x32xbf16>, vector<16x32xf32> -> vector<16x32xf32>
    %c0_13 = arith.constant 0 : index
    %c0_14 = arith.constant 0 : index
    %c0_15 = arith.constant 0 : index
    %30 = vector.load %arg5[%c0_13, %c0_14, %c0_15] : memref<1x32x32xbf16, #tpu.memory_space<vmem>>, vector<1x32x32xbf16>
    %31 = vector.shape_cast %30 : vector<1x32x32xbf16> to vector<32x32xbf16>
    %cst_16 = arith.constant dense<0.000000e+00> : vector<16x32xf32>
    %32 = tpu.matmul %26, %31, %cst_16 {dimension_numbers = #tpu.dot_dimension_numbers<[1], [0], [0], [1], [0, 0, 1, 1], [], []>} : vector<16x32xbf16>, vector<32x32xbf16>, vector<16x32xf32> -> vector<16x32xf32>
    %c0_17 = arith.constant 0 : index
    %c0_18 = arith.constant 0 : index
    %c0_19 = arith.constant 0 : index
    %33 = vector.load %arg6[%c0_17, %c0_18, %c0_19] : memref<1x32x32xbf16, #tpu.memory_space<vmem>>, vector<1x32x32xbf16>
    %34 = vector.shape_cast %33 : vector<1x32x32xbf16> to vector<32x32xbf16>
    %cst_20 = arith.constant dense<0.000000e+00> : vector<16x32xf32>
    %35 = tpu.matmul %26, %34, %cst_20 {dimension_numbers = #tpu.dot_dimension_numbers<[1], [0], [0], [1], [0, 0, 1, 1], [], []>} : vector<16x32xbf16>, vector<32x32xbf16>, vector<16x32xf32> -> vector<16x32xf32>
    %c0_21 = arith.constant 0 : index
    %c0_22 = arith.constant 0 : index
    %36 = vector.load %arg2[%c0_21, %c0_22] : memref<8x8xf32, #tpu.memory_space<vmem>>, vector<8x8xf32>
    %cst_23 = arith.constant 0.000000e+00 : f32
    %37 = vector.broadcast %cst_23 : f32 to vector<8x8xf32>
    %38 = arith.cmpf ogt, %36, %37 : vector<8x8xf32>
    %39 = vector.shape_cast %38 : vector<8x8xi1> to vector<1x8x8xi1>
    %40 = vector.broadcast %39 : vector<1x8x8xi1> to vector<2x8x8xi1>
    %cst_24 = arith.constant 0.000000e+00 : f32
    %41 = vector.broadcast %cst_24 : f32 to vector<16x32xf32>
    %42 = vector.extract_strided_slice %29 {offsets = [0, 0], sizes = [16, 8], strides = [1, 1]} : vector<16x32xf32> to vector<16x8xf32>
    %43 = vector.shape_cast %42 : vector<16x8xf32> to vector<2x8x8xf32>
    %44 = arith.truncf %43 : vector<2x8x8xf32> to vector<2x8x8xbf16>
    %45 = vector.extract_strided_slice %32 {offsets = [0, 0], sizes = [16, 8], strides = [1, 1]} : vector<16x32xf32> to vector<16x8xf32>
    %46 = vector.shape_cast %45 : vector<16x8xf32> to vector<2x8x8xf32>
    %47 = arith.truncf %46 : vector<2x8x8xf32> to vector<2x8x8xbf16>
    %48 = vector.extract_strided_slice %35 {offsets = [0, 0], sizes = [16, 8], strides = [1, 1]} : vector<16x32xf32> to vector<16x8xf32>
    %49 = vector.shape_cast %48 : vector<16x8xf32> to vector<2x8x8xf32>
    %50 = arith.truncf %49 : vector<2x8x8xf32> to vector<2x8x8xbf16>
    "tpu.trace_start"() <{level = 10 : i32, message = "bqd,bkd->bqk"}> : () -> ()
    %cst_25 = arith.constant dense<0.000000e+00> : vector<2x8x8xf32>
    %51 = tpu.matmul %44, %47, %cst_25 {dimension_numbers = #tpu.dot_dimension_numbers<[2], [2], [1], [1], [0, 0, 0, 1, 1, 1], [0], [0]>} : vector<2x8x8xbf16>, vector<2x8x8xbf16>, vector<2x8x8xf32> -> vector<2x8x8xf32>
    "tpu.trace_stop"() : () -> ()
    %cst_26 = arith.constant 0.353553385 : f32
    %52 = vector.broadcast %cst_26 : f32 to vector<2x8x8xf32>
    %53 = arith.mulf %51, %52 : vector<2x8x8xf32>
    %cst_27 = arith.constant -3.40282347E+38 : f32
    %54 = vector.broadcast %cst_27 : f32 to vector<2x8x8xf32>
    %55 = arith.select %40, %53, %54 : vector<2x8x8xi1>, vector<2x8x8xf32>
    %cst_28 = arith.constant dense<0xFF800000> : vector<2x8xf32>
    %56 = vector.multi_reduction <maximumf>, %55, %cst_28 [2] : vector<2x8x8xf32> to vector<2x8xf32>
    %57 = vector.shape_cast %56 : vector<2x8xf32> to vector<2x8x1xf32>
    %58 = vector.broadcast %57 : vector<2x8x1xf32> to vector<2x8x8xf32>
    %59 = arith.subf %55, %58 : vector<2x8x8xf32>
    %60 = math.exp %59 : vector<2x8x8xf32>
    %cst_29 = arith.constant dense<0.000000e+00> : vector<2x8xf32>
    %61 = vector.multi_reduction <add>, %60, %cst_29 [2] : vector<2x8x8xf32> to vector<2x8xf32>
    %62 = vector.shape_cast %61 : vector<2x8xf32> to vector<2x8x1xf32>
    %63 = tpu.reciprocal %62 {approx = true} : vector<2x8x1xf32> -> vector<2x8x1xf32>
    %64 = vector.broadcast %63 : vector<2x8x1xf32> to vector<2x8x8xf32>
    %65 = arith.mulf %60, %64 : vector<2x8x8xf32>
    %66 = arith.truncf %65 : vector<2x8x8xf32> to vector<2x8x8xbf16>
    "tpu.trace_start"() <{level = 10 : i32, message = "bqk,bkd->bqd"}> : () -> ()
    %cst_30 = arith.constant dense<0.000000e+00> : vector<2x8x8xf32>
    %67 = tpu.matmul %66, %50, %cst_30 {dimension_numbers = #tpu.dot_dimension_numbers<[2], [1], [1], [2], [0, 0, 0, 1, 1, 2], [0], [0]>} : vector<2x8x8xbf16>, vector<2x8x8xbf16>, vector<2x8x8xf32> -> vector<2x8x8xf32>
    "tpu.trace_stop"() : () -> ()
    %68 = vector.shape_cast %67 : vector<2x8x8xf32> to vector<16x8xf32>
    %69 = arith.truncf %68 : vector<16x8xf32> to vector<16x8xbf16>
    %c0_31 = arith.constant 0 : index
    %c0_32 = arith.constant 0 : index
    %c0_33 = arith.constant 0 : index
    %70 = vector.load %arg7[%c0_31, %c0_32, %c0_33] : memref<1x32x32xbf16, #tpu.memory_space<vmem>>, vector<1x8x32xbf16>
    %71 = vector.shape_cast %70 : vector<1x8x32xbf16> to vector<8x32xbf16>
    %cst_34 = arith.constant dense<0.000000e+00> : vector<16x32xf32>
    %72 = tpu.matmul %69, %71, %cst_34 {dimension_numbers = #tpu.dot_dimension_numbers<[1], [0], [0], [1], [0, 0, 1, 1], [], []>} : vector<16x8xbf16>, vector<8x32xbf16>, vector<16x32xf32> -> vector<16x32xf32>
    %73 = arith.addf %41, %72 : vector<16x32xf32>
    %74 = vector.extract_strided_slice %29 {offsets = [0, 8], sizes = [16, 8], strides = [1, 1]} : vector<16x32xf32> to vector<16x8xf32>
    %75 = vector.shape_cast %74 : vector<16x8xf32> to vector<2x8x8xf32>
    %76 = arith.truncf %75 : vector<2x8x8xf32> to vector<2x8x8xbf16>
    %77 = vector.extract_strided_slice %32 {offsets = [0, 8], sizes = [16, 8], strides = [1, 1]} : vector<16x32xf32> to vector<16x8xf32>
    %78 = vector.shape_cast %77 : vector<16x8xf32> to vector<2x8x8xf32>
    %79 = arith.truncf %78 : vector<2x8x8xf32> to vector<2x8x8xbf16>
    %80 = vector.extract_strided_slice %35 {offsets = [0, 8], sizes = [16, 8], strides = [1, 1]} : vector<16x32xf32> to vector<16x8xf32>
    %81 = vector.shape_cast %80 : vector<16x8xf32> to vector<2x8x8xf32>
    %82 = arith.truncf %81 : vector<2x8x8xf32> to vector<2x8x8xbf16>
    "tpu.trace_start"() <{level = 10 : i32, message = "bqd,bkd->bqk"}> : () -> ()
    %cst_35 = arith.constant dense<0.000000e+00> : vector<2x8x8xf32>
    %83 = tpu.matmul %76, %79, %cst_35 {dimension_numbers = #tpu.dot_dimension_numbers<[2], [2], [1], [1], [0, 0, 0, 1, 1, 1], [0], [0]>} : vector<2x8x8xbf16>, vector<2x8x8xbf16>, vector<2x8x8xf32> -> vector<2x8x8xf32>
    "tpu.trace_stop"() : () -> ()
    %cst_36 = arith.constant 0.353553385 : f32
    %84 = vector.broadcast %cst_36 : f32 to vector<2x8x8xf32>
    %85 = arith.mulf %83, %84 : vector<2x8x8xf32>
    %cst_37 = arith.constant -3.40282347E+38 : f32
    %86 = vector.broadcast %cst_37 : f32 to vector<2x8x8xf32>
    %87 = arith.select %40, %85, %86 : vector<2x8x8xi1>, vector<2x8x8xf32>
    %cst_38 = arith.constant dense<0xFF800000> : vector<2x8xf32>
    %88 = vector.multi_reduction <maximumf>, %87, %cst_38 [2] : vector<2x8x8xf32> to vector<2x8xf32>
    %89 = vector.shape_cast %88 : vector<2x8xf32> to vector<2x8x1xf32>
    %90 = vector.broadcast %89 : vector<2x8x1xf32> to vector<2x8x8xf32>
    %91 = arith.subf %87, %90 : vector<2x8x8xf32>
    %92 = math.exp %91 : vector<2x8x8xf32>
    %cst_39 = arith.constant dense<0.000000e+00> : vector<2x8xf32>
    %93 = vector.multi_reduction <add>, %92, %cst_39 [2] : vector<2x8x8xf32> to vector<2x8xf32>
    %94 = vector.shape_cast %93 : vector<2x8xf32> to vector<2x8x1xf32>
    %95 = tpu.reciprocal %94 {approx = true} : vector<2x8x1xf32> -> vector<2x8x1xf32>
    %96 = vector.broadcast %95 : vector<2x8x1xf32> to vector<2x8x8xf32>
    %97 = arith.mulf %92, %96 : vector<2x8x8xf32>
    %98 = arith.truncf %97 : vector<2x8x8xf32> to vector<2x8x8xbf16>
    "tpu.trace_start"() <{level = 10 : i32, message = "bqk,bkd->bqd"}> : () -> ()
    %cst_40 = arith.constant dense<0.000000e+00> : vector<2x8x8xf32>
    %99 = tpu.matmul %98, %82, %cst_40 {dimension_numbers = #tpu.dot_dimension_numbers<[2], [1], [1], [2], [0, 0, 0, 1, 1, 2], [0], [0]>} : vector<2x8x8xbf16>, vector<2x8x8xbf16>, vector<2x8x8xf32> -> vector<2x8x8xf32>
    "tpu.trace_stop"() : () -> ()
    %100 = vector.shape_cast %99 : vector<2x8x8xf32> to vector<16x8xf32>
    %101 = arith.truncf %100 : vector<16x8xf32> to vector<16x8xbf16>
    %c0_41 = arith.constant 0 : index
    %c8 = arith.constant 8 : index
    %c0_42 = arith.constant 0 : index
    %102 = vector.load %arg7[%c0_41, %c8, %c0_42] : memref<1x32x32xbf16, #tpu.memory_space<vmem>>, vector<1x8x32xbf16>
    %103 = vector.shape_cast %102 : vector<1x8x32xbf16> to vector<8x32xbf16>
    %cst_43 = arith.constant dense<0.000000e+00> : vector<16x32xf32>
    %104 = tpu.matmul %101, %103, %cst_43 {dimension_numbers = #tpu.dot_dimension_numbers<[1], [0], [0], [1], [0, 0, 1, 1], [], []>} : vector<16x8xbf16>, vector<8x32xbf16>, vector<16x32xf32> -> vector<16x32xf32>
    %105 = arith.addf %73, %104 : vector<16x32xf32>
    %106 = vector.extract_strided_slice %29 {offsets = [0, 16], sizes = [16, 8], strides = [1, 1]} : vector<16x32xf32> to vector<16x8xf32>
    %107 = vector.shape_cast %106 : vector<16x8xf32> to vector<2x8x8xf32>
    %108 = arith.truncf %107 : vector<2x8x8xf32> to vector<2x8x8xbf16>
    %109 = vector.extract_strided_slice %32 {offsets = [0, 16], sizes = [16, 8], strides = [1, 1]} : vector<16x32xf32> to vector<16x8xf32>
    %110 = vector.shape_cast %109 : vector<16x8xf32> to vector<2x8x8xf32>
    %111 = arith.truncf %110 : vector<2x8x8xf32> to vector<2x8x8xbf16>
    %112 = vector.extract_strided_slice %35 {offsets = [0, 16], sizes = [16, 8], strides = [1, 1]} : vector<16x32xf32> to vector<16x8xf32>
    %113 = vector.shape_cast %112 : vector<16x8xf32> to vector<2x8x8xf32>
    %114 = arith.truncf %113 : vector<2x8x8xf32> to vector<2x8x8xbf16>
    "tpu.trace_start"() <{level = 10 : i32, message = "bqd,bkd->bqk"}> : () -> ()
    %cst_44 = arith.constant dense<0.000000e+00> : vector<2x8x8xf32>
    %115 = tpu.matmul %108, %111, %cst_44 {dimension_numbers = #tpu.dot_dimension_numbers<[2], [2], [1], [1], [0, 0, 0, 1, 1, 1], [0], [0]>} : vector<2x8x8xbf16>, vector<2x8x8xbf16>, vector<2x8x8xf32> -> vector<2x8x8xf32>
    "tpu.trace_stop"() : () -> ()
    %cst_45 = arith.constant 0.353553385 : f32
    %116 = vector.broadcast %cst_45 : f32 to vector<2x8x8xf32>
    %117 = arith.mulf %115, %116 : vector<2x8x8xf32>
    %cst_46 = arith.constant -3.40282347E+38 : f32
    %118 = vector.broadcast %cst_46 : f32 to vector<2x8x8xf32>
    %119 = arith.select %40, %117, %118 : vector<2x8x8xi1>, vector<2x8x8xf32>
    %cst_47 = arith.constant dense<0xFF800000> : vector<2x8xf32>
    %120 = vector.multi_reduction <maximumf>, %119, %cst_47 [2] : vector<2x8x8xf32> to vector<2x8xf32>
    %121 = vector.shape_cast %120 : vector<2x8xf32> to vector<2x8x1xf32>
    %122 = vector.broadcast %121 : vector<2x8x1xf32> to vector<2x8x8xf32>
    %123 = arith.subf %119, %122 : vector<2x8x8xf32>
    %124 = math.exp %123 : vector<2x8x8xf32>
    %cst_48 = arith.constant dense<0.000000e+00> : vector<2x8xf32>
    %125 = vector.multi_reduction <add>, %124, %cst_48 [2] : vector<2x8x8xf32> to vector<2x8xf32>
    %126 = vector.shape_cast %125 : vector<2x8xf32> to vector<2x8x1xf32>
    %127 = tpu.reciprocal %126 {approx = true} : vector<2x8x1xf32> -> vector<2x8x1xf32>
    %128 = vector.broadcast %127 : vector<2x8x1xf32> to vector<2x8x8xf32>
    %129 = arith.mulf %124, %128 : vector<2x8x8xf32>
    %130 = arith.truncf %129 : vector<2x8x8xf32> to vector<2x8x8xbf16>
    "tpu.trace_start"() <{level = 10 : i32, message = "bqk,bkd->bqd"}> : () -> ()
    %cst_49 = arith.constant dense<0.000000e+00> : vector<2x8x8xf32>
    %131 = tpu.matmul %130, %114, %cst_49 {dimension_numbers = #tpu.dot_dimension_numbers<[2], [1], [1], [2], [0, 0, 0, 1, 1, 2], [0], [0]>} : vector<2x8x8xbf16>, vector<2x8x8xbf16>, vector<2x8x8xf32> -> vector<2x8x8xf32>
    "tpu.trace_stop"() : () -> ()
    %132 = vector.shape_cast %131 : vector<2x8x8xf32> to vector<16x8xf32>
    %133 = arith.truncf %132 : vector<16x8xf32> to vector<16x8xbf16>
    %c0_50 = arith.constant 0 : index
    %c16 = arith.constant 16 : index
    %c0_51 = arith.constant 0 : index
    %134 = vector.load %arg7[%c0_50, %c16, %c0_51] : memref<1x32x32xbf16, #tpu.memory_space<vmem>>, vector<1x8x32xbf16>
    %135 = vector.shape_cast %134 : vector<1x8x32xbf16> to vector<8x32xbf16>
    %cst_52 = arith.constant dense<0.000000e+00> : vector<16x32xf32>
    %136 = tpu.matmul %133, %135, %cst_52 {dimension_numbers = #tpu.dot_dimension_numbers<[1], [0], [0], [1], [0, 0, 1, 1], [], []>} : vector<16x8xbf16>, vector<8x32xbf16>, vector<16x32xf32> -> vector<16x32xf32>
    %137 = arith.addf %105, %136 : vector<16x32xf32>
    %138 = vector.extract_strided_slice %29 {offsets = [0, 24], sizes = [16, 8], strides = [1, 1]} : vector<16x32xf32> to vector<16x8xf32>
    %139 = vector.shape_cast %138 : vector<16x8xf32> to vector<2x8x8xf32>
    %140 = arith.truncf %139 : vector<2x8x8xf32> to vector<2x8x8xbf16>
    %141 = vector.extract_strided_slice %32 {offsets = [0, 24], sizes = [16, 8], strides = [1, 1]} : vector<16x32xf32> to vector<16x8xf32>
    %142 = vector.shape_cast %141 : vector<16x8xf32> to vector<2x8x8xf32>
    %143 = arith.truncf %142 : vector<2x8x8xf32> to vector<2x8x8xbf16>
    %144 = vector.extract_strided_slice %35 {offsets = [0, 24], sizes = [16, 8], strides = [1, 1]} : vector<16x32xf32> to vector<16x8xf32>
    %145 = vector.shape_cast %144 : vector<16x8xf32> to vector<2x8x8xf32>
    %146 = arith.truncf %145 : vector<2x8x8xf32> to vector<2x8x8xbf16>
    "tpu.trace_start"() <{level = 10 : i32, message = "bqd,bkd->bqk"}> : () -> ()
    %cst_53 = arith.constant dense<0.000000e+00> : vector<2x8x8xf32>
    %147 = tpu.matmul %140, %143, %cst_53 {dimension_numbers = #tpu.dot_dimension_numbers<[2], [2], [1], [1], [0, 0, 0, 1, 1, 1], [0], [0]>} : vector<2x8x8xbf16>, vector<2x8x8xbf16>, vector<2x8x8xf32> -> vector<2x8x8xf32>
    "tpu.trace_stop"() : () -> ()
    %cst_54 = arith.constant 0.353553385 : f32
    %148 = vector.broadcast %cst_54 : f32 to vector<2x8x8xf32>
    %149 = arith.mulf %147, %148 : vector<2x8x8xf32>
    %cst_55 = arith.constant -3.40282347E+38 : f32
    %150 = vector.broadcast %cst_55 : f32 to vector<2x8x8xf32>
    %151 = arith.select %40, %149, %150 : vector<2x8x8xi1>, vector<2x8x8xf32>
    %cst_56 = arith.constant dense<0xFF800000> : vector<2x8xf32>
    %152 = vector.multi_reduction <maximumf>, %151, %cst_56 [2] : vector<2x8x8xf32> to vector<2x8xf32>
    %153 = vector.shape_cast %152 : vector<2x8xf32> to vector<2x8x1xf32>
    %154 = vector.broadcast %153 : vector<2x8x1xf32> to vector<2x8x8xf32>
    %155 = arith.subf %151, %154 : vector<2x8x8xf32>
    %156 = math.exp %155 : vector<2x8x8xf32>
    %cst_57 = arith.constant dense<0.000000e+00> : vector<2x8xf32>
    %157 = vector.multi_reduction <add>, %156, %cst_57 [2] : vector<2x8x8xf32> to vector<2x8xf32>
    %158 = vector.shape_cast %157 : vector<2x8xf32> to vector<2x8x1xf32>
    %159 = tpu.reciprocal %158 {approx = true} : vector<2x8x1xf32> -> vector<2x8x1xf32>
    %160 = vector.broadcast %159 : vector<2x8x1xf32> to vector<2x8x8xf32>
    %161 = arith.mulf %156, %160 : vector<2x8x8xf32>
    %162 = arith.truncf %161 : vector<2x8x8xf32> to vector<2x8x8xbf16>
    "tpu.trace_start"() <{level = 10 : i32, message = "bqk,bkd->bqd"}> : () -> ()
    %cst_58 = arith.constant dense<0.000000e+00> : vector<2x8x8xf32>
    %163 = tpu.matmul %162, %146, %cst_58 {dimension_numbers = #tpu.dot_dimension_numbers<[2], [1], [1], [2], [0, 0, 0, 1, 1, 2], [0], [0]>} : vector<2x8x8xbf16>, vector<2x8x8xbf16>, vector<2x8x8xf32> -> vector<2x8x8xf32>
    "tpu.trace_stop"() : () -> ()
    %164 = vector.shape_cast %163 : vector<2x8x8xf32> to vector<16x8xf32>
    %165 = arith.truncf %164 : vector<16x8xf32> to vector<16x8xbf16>
    %c0_59 = arith.constant 0 : index
    %c24 = arith.constant 24 : index
    %c0_60 = arith.constant 0 : index
    %166 = vector.load %arg7[%c0_59, %c24, %c0_60] : memref<1x32x32xbf16, #tpu.memory_space<vmem>>, vector<1x8x32xbf16>
    %167 = vector.shape_cast %166 : vector<1x8x32xbf16> to vector<8x32xbf16>
    %cst_61 = arith.constant dense<0.000000e+00> : vector<16x32xf32>
    %168 = tpu.matmul %165, %167, %cst_61 {dimension_numbers = #tpu.dot_dimension_numbers<[1], [0], [0], [1], [0, 0, 1, 1], [], []>} : vector<16x8xbf16>, vector<8x32xbf16>, vector<16x32xf32> -> vector<16x32xf32>
    %169 = arith.addf %137, %168 : vector<16x32xf32>
    %c0_62 = arith.constant 0 : index
    %c0_63 = arith.constant 0 : index
    %c0_64 = arith.constant 0 : index
    %170 = vector.load %arg8[%c0_62, %c0_63, %c0_64] : memref<1x1x32xf32, #tpu.memory_space<vmem>>, vector<1x1x32xf32>
    %171 = vector.shape_cast %170 : vector<1x1x32xf32> to vector<1x32xf32>
    %cst_65 = arith.constant dense<0.000000e+00> : vector<16xf32>
    %172 = vector.multi_reduction <add>, %169, %cst_65 [1] : vector<16x32xf32> to vector<16xf32>
    %173 = vector.shape_cast %172 : vector<16xf32> to vector<16x1xf32>
    %cst_66 = arith.constant 3.200000e+01 : f32
    %174 = vector.broadcast %cst_66 : f32 to vector<16x1xf32>
    %175 = arith.divf %173, %174 : vector<16x1xf32>
    %176 = vector.broadcast %175 : vector<16x1xf32> to vector<16x32xf32>
    %177 = arith.subf %169, %176 : vector<16x32xf32>
    %178 = arith.mulf %177, %177 : vector<16x32xf32>
    %cst_67 = arith.constant dense<0.000000e+00> : vector<16xf32>
    %179 = vector.multi_reduction <add>, %178, %cst_67 [1] : vector<16x32xf32> to vector<16xf32>
    %180 = vector.shape_cast %179 : vector<16xf32> to vector<16x1xf32>
    %cst_68 = arith.constant 3.200000e+01 : f32
    %181 = vector.broadcast %cst_68 : f32 to vector<16x1xf32>
    %182 = arith.divf %180, %181 : vector<16x1xf32>
    %183 = vector.broadcast %175 : vector<16x1xf32> to vector<16x32xf32>
    %184 = arith.subf %169, %183 : vector<16x32xf32>
    %cst_69 = arith.constant 9.99999974E-6 : f32
    %185 = vector.broadcast %cst_69 : f32 to vector<16x1xf32>
    %186 = arith.addf %182, %185 : vector<16x1xf32>
    %187 = math.rsqrt %186 : vector<16x1xf32>
    %188 = vector.broadcast %187 : vector<16x1xf32> to vector<16x32xf32>
    %189 = arith.mulf %184, %188 : vector<16x32xf32>
    %190 = vector.broadcast %171 : vector<1x32xf32> to vector<16x32xf32>
    %191 = arith.mulf %189, %190 : vector<16x32xf32>
    %192 = arith.truncf %191 : vector<16x32xf32> to vector<16x32xbf16>
    %c0_70 = arith.constant 0 : index
    %c0_71 = arith.constant 0 : index
    %c0_72 = arith.constant 0 : index
    %193 = vector.load %arg9[%c0_70, %c0_71, %c0_72] : memref<1x32x64xbf16, #tpu.memory_space<vmem>>, vector<1x32x64xbf16>
    %194 = vector.shape_cast %193 : vector<1x32x64xbf16> to vector<32x64xbf16>
    %cst_73 = arith.constant dense<0.000000e+00> : vector<16x64xf32>
    %195 = tpu.matmul %192, %194, %cst_73 {dimension_numbers = #tpu.dot_dimension_numbers<[1], [0], [0], [1], [0, 0, 1, 1], [], []>} : vector<16x32xbf16>, vector<32x64xbf16>, vector<16x64xf32> -> vector<16x64xf32>
    %c0_74 = arith.constant 0 : index
    %c0_75 = arith.constant 0 : index
    %c0_76 = arith.constant 0 : index
    %196 = vector.load %arg10[%c0_74, %c0_75, %c0_76] : memref<1x1x64xf32, #tpu.memory_space<vmem>>, vector<1x1x64xf32>
    %197 = vector.shape_cast %196 : vector<1x1x64xf32> to vector<1x64xf32>
    %198 = vector.broadcast %197 : vector<1x64xf32> to vector<16x64xf32>
    %199 = arith.addf %195, %198 : vector<16x64xf32>
    %cst_77 = arith.constant 5.000000e-01 : f32
    %200 = vector.broadcast %cst_77 : f32 to vector<16x64xf32>
    %201 = arith.mulf %200, %199 : vector<16x64xf32>
    %cst_78 = arith.constant 0.707106769 : f32
    %202 = vector.broadcast %cst_78 : f32 to vector<16x64xf32>
    %203 = arith.mulf %199, %202 : vector<16x64xf32>
    %204 = math.erf %203 : vector<16x64xf32>
    %cst_79 = arith.constant 1.000000e+00 : f32
    %205 = vector.broadcast %cst_79 : f32 to vector<16x64xf32>
    %206 = arith.addf %205, %204 : vector<16x64xf32>
    %207 = arith.mulf %201, %206 : vector<16x64xf32>
    %208 = arith.truncf %207 : vector<16x64xf32> to vector<16x64xbf16>
    %c0_80 = arith.constant 0 : index
    %c0_81 = arith.constant 0 : index
    %c0_82 = arith.constant 0 : index
    %209 = vector.load %arg11[%c0_80, %c0_81, %c0_82] : memref<1x64x32xbf16, #tpu.memory_space<vmem>>, vector<1x64x32xbf16>
    %210 = vector.shape_cast %209 : vector<1x64x32xbf16> to vector<64x32xbf16>
    %cst_83 = arith.constant dense<0.000000e+00> : vector<16x32xf32>
    %211 = tpu.matmul %208, %210, %cst_83 {dimension_numbers = #tpu.dot_dimension_numbers<[1], [0], [0], [1], [0, 0, 1, 1], [], []>} : vector<16x64xbf16>, vector<64x32xbf16>, vector<16x32xf32> -> vector<16x32xf32>
    %c0_84 = arith.constant 0 : index
    %c0_85 = arith.constant 0 : index
    %c0_86 = arith.constant 0 : index
    %212 = vector.load %arg12[%c0_84, %c0_85, %c0_86] : memref<1x1x32xf32, #tpu.memory_space<vmem>>, vector<1x1x32xf32>
    %213 = vector.shape_cast %212 : vector<1x1x32xf32> to vector<1x32xf32>
    %214 = vector.broadcast %213 : vector<1x32xf32> to vector<16x32xf32>
    %215 = arith.addf %211, %214 : vector<16x32xf32>
    %c0_87 = arith.constant 0 : index
    %c0_88 = arith.constant 0 : index
    %216 = vector.load %arg15[%c0_87, %c0_88] : memref<16x32xf32, #tpu.memory_space<vmem>>, vector<16x32xf32>
    tpu.vector_store %arg15[%c0_87, %c0_88], %215 {strides = array<i32>} : memref<16x32xf32, #tpu.memory_space<vmem>>, vector<16x32xf32>,
    %c1_i32 = arith.constant 1 : i32
    %217 = arith.cmpi eq, %arg0, %c1_i32 : i32
    %218 = arith.extui %217 : i1 to i32
    %c0_i32_89 = arith.constant 0 : i32
    %219 = arith.cmpi ne, %218, %c0_i32_89 : i32
    scf.if %219 {
      %c0_90 = arith.constant 0 : index
      %c0_91 = arith.constant 0 : index
      %220 = vector.load %arg13[%c0_90, %c0_91] : memref<1x32xf32, #tpu.memory_space<vmem>>, vector<1x32xf32>
      %cst_92 = arith.constant dense<0.000000e+00> : vector<16xf32>
      %221 = vector.multi_reduction <add>, %215, %cst_92 [1] : vector<16x32xf32> to vector<16xf32>
      %222 = vector.shape_cast %221 : vector<16xf32> to vector<16x1xf32>
      %cst_93 = arith.constant 3.200000e+01 : f32
      %223 = vector.broadcast %cst_93 : f32 to vector<16x1xf32>
      %224 = arith.divf %222, %223 : vector<16x1xf32>
      %225 = vector.broadcast %224 : vector<16x1xf32> to vector<16x32xf32>
      %226 = arith.subf %215, %225 : vector<16x32xf32>
      %227 = arith.mulf %226, %226 : vector<16x32xf32>
      %cst_94 = arith.constant dense<0.000000e+00> : vector<16xf32>
      %228 = vector.multi_reduction <add>, %227, %cst_94 [1] : vector<16x32xf32> to vector<16xf32>
      %229 = vector.shape_cast %228 : vector<16xf32> to vector<16x1xf32>
      %cst_95 = arith.constant 3.200000e+01 : f32
      %230 = vector.broadcast %cst_95 : f32 to vector<16x1xf32>
      %231 = arith.divf %229, %230 : vector<16x1xf32>
      %232 = vector.broadcast %224 : vector<16x1xf32> to vector<16x32xf32>
      %233 = arith.subf %215, %232 : vector<16x32xf32>
      %cst_96 = arith.constant 9.99999974E-6 : f32
      %234 = vector.broadcast %cst_96 : f32 to vector<16x1xf32>
      %235 = arith.addf %231, %234 : vector<16x1xf32>
      %236 = math.rsqrt %235 : vector<16x1xf32>
      %237 = vector.broadcast %236 : vector<16x1xf32> to vector<16x32xf32>
      %238 = arith.mulf %233, %237 : vector<16x32xf32>
      %239 = vector.broadcast %220 : vector<1x32xf32> to vector<16x32xf32>
      %240 = arith.mulf %238, %239 : vector<16x32xf32>
      %c0_97 = arith.constant 0 : index
      %c0_98 = arith.constant 0 : index
      %241 = vector.load %arg14[%c0_97, %c0_98] : memref<16x32xf32, #tpu.memory_space<vmem>>, vector<16x32xf32>
      tpu.vector_store %arg14[%c0_97, %c0_98], %240 {strides = array<i32>} : memref<16x32xf32, #tpu.memory_space<vmem>>, vector<16x32xf32>,
    } else {
    }
    return
  }
  func.func @transform_0(%arg0: i32) -> (i32, i32) {
    %c0_i32 = arith.constant 0 : i32
    %c0_i32_0 = arith.constant 0 : i32
    %c0_i32_1 = arith.constant 0 : i32
    return %c0_i32, %c0_i32_0 : i32, i32
  }
  func.func @transform_1(%arg0: i32) -> (i32, i32) {
    %c0_i32 = arith.constant 0 : i32
    %c0_i32_0 = arith.constant 0 : i32
    %c0_i32_1 = arith.constant 0 : i32
    return %c0_i32, %c0_i32_0 : i32, i32
  }
  func.func @transform_2(%arg0: i32) -> (i32, i32, i32) {
    %c0_i32 = arith.constant 0 : i32
    %c0_i32_0 = arith.constant 0 : i32
    %c0_i32_1 = arith.constant 0 : i32
    return %arg0, %c0_i32, %c0_i32_0 : i32, i32, i32
  }
  func.func @transform_3(%arg0: i32) -> (i32, i32, i32) {
    %c0_i32 = arith.constant 0 : i32
    %c0_i32_0 = arith.constant 0 : i32
    %c0_i32_1 = arith.constant 0 : i32
    return %arg0, %c0_i32, %c0_i32_0 : i32, i32, i32
  }
  func.func @transform_4(%arg0: i32) -> (i32, i32, i32) {
    %c0_i32 = arith.constant 0 : i32
    %c0_i32_0 = arith.constant 0 : i32
    %c0_i32_1 = arith.constant 0 : i32
    return %arg0, %c0_i32, %c0_i32_0 : i32, i32, i32
  }
  func.func @transform_5(%arg0: i32) -> (i32, i32, i32) {
    %c0_i32 = arith.constant 0 : i32
    %c0_i32_0 = arith.constant 0 : i32
    %c0_i32_1 = arith.constant 0 : i32
    return %arg0, %c0_i32, %c0_i32_0 : i32, i32, i32
  }
  func.func @transform_6(%arg0: i32) -> (i32, i32, i32) {
    %c0_i32 = arith.constant 0 : i32
    %c0_i32_0 = arith.constant 0 : i32
    %c0_i32_1 = arith.constant 0 : i32
    return %arg0, %c0_i32, %c0_i32_0 : i32, i32, i32
  }
  func.func @transform_7(%arg0: i32) -> (i32, i32, i32) {
    %c0_i32 = arith.constant 0 : i32
    %c0_i32_0 = arith.constant 0 : i32
    %c0_i32_1 = arith.constant 0 : i32
    return %arg0, %c0_i32, %c0_i32_0 : i32, i32, i32
  }
  func.func @transform_8(%arg0: i32) -> (i32, i32, i32) {
    %c0_i32 = arith.constant 0 : i32
    %c0_i32_0 = arith.constant 0 : i32
    %c0_i32_1 = arith.constant 0 : i32
    return %arg0, %c0_i32, %c0_i32_0 : i32, i32, i32
  }
  func.func @transform_9(%arg0: i32) -> (i32, i32, i32) {
    %c0_i32 = arith.constant 0 : i32
    %c0_i32_0 = arith.constant 0 : i32
    %c0_i32_1 = arith.constant 0 : i32
    return %arg0, %c0_i32, %c0_i32_0 : i32, i32, i32
  }
  func.func @transform_10(%arg0: i32) -> (i32, i32, i32) {
    %c0_i32 = arith.constant 0 : i32
    %c0_i32_0 = arith.constant 0 : i32
    %c0_i32_1 = arith.constant 0 : i32
    return %arg0, %c0_i32, %c0_i32_0 : i32, i32, i32
  }
  func.func @transform_11(%arg0: i32) -> (i32, i32, i32) {
    %c0_i32 = arith.constant 0 : i32
    %c0_i32_0 = arith.constant 0 : i32
    %c0_i32_1 = arith.constant 0 : i32
    return %arg0, %c0_i32, %c0_i32_0 : i32, i32, i32
  }
  func.func @transform_12(%arg0: i32) -> (i32, i32) {
    %c0_i32 = arith.constant 0 : i32
    %c0_i32_0 = arith.constant 0 : i32
    %c0_i32_1 = arith.constant 0 : i32
    return %c0_i32, %c0_i32_0 : i32, i32
  }
  func.func @transform_13(%arg0: i32) -> (i32, i32) {
    %c0_i32 = arith.constant 0 : i32
    %c0_i32_0 = arith.constant 0 : i32
    %c0_i32_1 = arith.constant 0 : i32
    return %c0_i32, %c0_i32_0 : i32, i32
  }
}

</mosaic_0001>

<llo_original>
// kernel: tpu_custom_call.1
$region0: #{tpu_custom_call.1}
  #allocation0 [shape = 'u32[]', space=smem, size = 0x4, offset = 0x4, fixed_abs, tag = 'smem constant byte address 0x4 - core index']
  #allocation1 [shape = 'u32[144,128]{1,0:T(1,128)}', space=vmem, size = 0x12000, scoped, tag = 'internal scratch']
  #allocation2 [shape = 'f32[16,32]{1,0:T(8,128)}', space=vmem, size = 0x2000, scoped, tag = 'scratch operand']
  %s0 = inlined_call_operand.hbm [shape: f32[16,32], index: 0, kind: input, shape index: {}]
  %s1 = inlined_call_operand.hbm [shape: f32[8,8], index: 1, kind: input, shape index: {}]
  %s2 = inlined_call_operand.vmem [shape: f32[2,1,32], index: 2, kind: input, shape index: {}]
  %s3 = inlined_call_operand.vmem [shape: bf16[2,32,32], index: 3, kind: input, shape index: {}]
  %s4 = inlined_call_operand.vmem [shape: bf16[2,32,32], index: 4, kind: input, shape index: {}]
  %s5 = inlined_call_operand.vmem [shape: bf16[2,32,32], index: 5, kind: input, shape index: {}]
  %s6 = inlined_call_operand.hbm [shape: bf16[2,32,32], index: 6, kind: input, shape index: {}]
  %s7 = inlined_call_operand.vmem [shape: f32[2,1,32], index: 7, kind: input, shape index: {}]
  %s8 = inlined_call_operand.hbm [shape: bf16[2,32,64], index: 8, kind: input, shape index: {}]
  %s9 = inlined_call_operand.vmem [shape: f32[2,1,64], index: 9, kind: input, shape index: {}]
  %s10 = inlined_call_operand.vmem [shape: bf16[2,64,32], index: 10, kind: input, shape index: {}]
  %s11 = inlined_call_operand.vmem [shape: f32[2,1,32], index: 11, kind: input, shape index: {}]
  %s12 = inlined_call_operand.vmem [shape: f32[1,32], index: 12, kind: input, shape index: {}]
  %s13 = inlined_call_operand.hbm [shape: f32[16,32], index: 13, kind: output, shape index: {}]
  %s14 = sld [smem:[#allocation0]]
  $region109: #{tpu_custom_call.1} parent=0
    _
  %s16 = ssub.s32 1, %s14
  %s17 = scalar_select 0, %s16, %s14
  $region1: #{tpu_custom_call.1} parent=0
    #allocation3 [shape = 'u8[8192]{0}', space=vmem, size = 0x2000, scoped, tag = 'input window, operand 0, single buffered']
    #allocation4 [shape = 's32[2]{0}', space=sflag, size = 0x8, scoped, tag = 'scoped memory for tpu_custom_call.1']
    #allocation5 [shape = 's32[2]{0}', space=sflag, size = 0x8, scoped, tag = 'scoped memory for tpu_custom_call.1']
    #allocation6 [shape = 'u8[4096]{0}', space=vmem, size = 0x1000, scoped, tag = 'input window, operand 1, single buffered']
    #allocation7 [shape = 's32[1]{0}', space=sflag, size = 0x4, scoped, tag = 'scoped memory for tpu_custom_call.1']
    #allocation8 [shape = 'u8[16384]{0}', space=vmem, size = 0x4000, scoped, tag = 'input window, operand 6']
    #allocation9 [shape = 'u8[16384]{0}', space=vmem, size = 0x4000, scoped, tag = 'input window, operand 8']
    #allocation10 [shape = 'u8[8192]{0}', space=vmem, size = 0x2000, scoped, tag = 'output window, operand 0, single buffered']
    %18 = vsyncpa [#allocation4], 0
    %19 = vsyncpa [#allocation7], 0
    %20 = vsyncpa [#allocation5], 0
    loop: start=0, step=1, limit=4
    $region2: #{tpu_custom_call.1} parent=1 // loop_pre_header
      _
    $region3: #{tpu_custom_call.1} parent=1 // loop_header
      %s22 = sphi 0, %s26
      %p23 = scmp.ge.s32.totalorder %s22, 4
      %s30 = sphi 0, %s30
      %s32 = sphi 0, %s30
      %s33 = sphi 0, %s32
      %s47 = sphi 0, %s33
      %s51 = sphi 0, %s51
      %s53 = sphi 0, %s51
      %s54 = sphi 0, %s53
      %s68 = sphi 0, %s54
      %s74 = sphi 0, %s76
      %s77 = sphi 0, %s74
      %s78 = sphi 0, %s77
      %s94 = sphi 0, %s78
      %s100 = sphi 0, %s102
      %s103 = sphi 0, %s100
      %s104 = sphi 0, %s103
      %s120 = sphi 0, %s104
      %s126 = sphi 0, %s128
      %s129 = sphi 0, %s126
      %s130 = sphi 0, %s129
      %s146 = sphi 0, %s130
      %s152 = sphi 0, %s154
      %s155 = sphi 0, %s152
      %s156 = sphi 0, %s155
      %s172 = sphi 0, %s156
      %s178 = sphi 0, %s180
      %s181 = sphi 0, %s178
      %s182 = sphi 0, %s181
      %s198 = sphi 0, %s182
      %s204 = sphi 0, %s206
      %s207 = sphi 0, %s204
      %s208 = sphi 0, %s207
      %s224 = sphi 0, %s208
      %s230 = sphi 0, %s232
      %s233 = sphi 0, %s230
      %s234 = sphi 0, %s233
      %s250 = sphi 0, %s234
      %s256 = sphi 0, %s258
      %s259 = sphi 0, %s256
      %s260 = sphi 0, %s259
      %s276 = sphi 0, %s260
      %s282 = sphi 0, %s284
      %s285 = sphi 0, %s282
      %s286 = sphi 0, %s285
      %s302 = sphi 0, %s286
      %s308 = sphi 0, %s310
      %s311 = sphi 0, %s308
      %s312 = sphi 0, %s311
      %s328 = sphi 0, %s312
      %s332 = sphi 0, %s332
      %s334 = sphi 0, %s332
      %s335 = sphi 0, %s334
      %s349 = sphi 0, %s335
      %s353 = sphi 0, %s353
      %s355 = sphi 0, %s353
      %s356 = sphi 0, %s355
      %s370 = sphi 0, %s356
    $region4: #{tpu_custom_call.1} parent=1 // loop_header_branch
      %25 = sbr.rel (%p23) target = $region8
    $region5: #{tpu_custom_call.1} parent=1 // loop_body
      %s27 = ssub.s32 %s22, 1
      %s28 = ssub.s32 %s22, 2
      %s29 = sadd.s32 %s22, 1
      %s31 = sadd.s32 %s30, 1
      %p34 = scmp.eq.s32.totalorder %s22, 1
      %p35 = scmp.ne.s32.totalorder %s30, %s32
      %p36 = scmp.eq.s32.totalorder %s22, 0
      %p37 = por %p35, %p36
      %p38 = scmp.ne.s32.totalorder %s30, %s32
      %p39 = scmp.eq.s32.totalorder %s27, 1
      %p40 = por %p38, %p39
      %p41 = scmp.ne.s32.totalorder %s32, %s33
      %p42 = scmp.eq.s32.totalorder %s27, 0
      %p43 = por %p41, %p42
      %p44 = scmp.ne.s32.totalorder %s32, %s33
      %p45 = scmp.eq.s32.totalorder %s28, 1
      %p46 = por %p44, %p45
      %p48 = scmp.ne.s32.totalorder %s33, %s47
      %p49 = scmp.eq.s32.totalorder %s28, 0
      %p50 = por %p48, %p49
      %s52 = sadd.s32 %s51, 1
      %p55 = scmp.eq.s32.totalorder %s22, 1
      %p56 = scmp.ne.s32.totalorder %s51, %s53
      %p57 = scmp.eq.s32.totalorder %s22, 0
      %p58 = por %p56, %p57
      %p59 = scmp.ne.s32.totalorder %s51, %s53
      %p60 = scmp.eq.s32.totalorder %s27, 1
      %p61 = por %p59, %p60
      %p62 = scmp.ne.s32.totalorder %s53, %s54
      %p63 = scmp.eq.s32.totalorder %s27, 0
      %p64 = por %p62, %p63
      %p65 = scmp.ne.s32.totalorder %s53, %s54
      %p66 = scmp.eq.s32.totalorder %s28, 1
      %p67 = por %p65, %p66
      %p69 = scmp.ne.s32.totalorder %s54, %s68
      %p70 = scmp.eq.s32.totalorder %s28, 0
      %p71 = por %p69, %p70
      %s72 = ssub.s32 %s22, %s29
      %p73 = scmp.eq.s32.totalorder %s72, 0
      %s75 = sadd.s32 %s74, 1
      %s76 = scalar_select %p73, %s74, %s75
      %p79 = pneg %p73
      %p80 = scmp.eq.s32.totalorder %s22, 1
      %p81 = por %p79, %p80
      %p82 = scmp.ne.s32.totalorder %s74, %s77
      %p83 = scmp.eq.s32.totalorder %s22, 0
      %p84 = por %p82, %p83
      %p85 = scmp.ne.s32.totalorder %s74, %s77
      %p86 = scmp.eq.s32.totalorder %s27, 1
      %p87 = por %p85, %p86
      %p88 = scmp.ne.s32.totalorder %s77, %s78
      %p89 = scmp.eq.s32.totalorder %s27, 0
      %p90 = por %p88, %p89
      %p91 = scmp.ne.s32.totalorder %s77, %s78
      %p92 = scmp.eq.s32.totalorder %s28, 1
      %p93 = por %p91, %p92
      %p95 = scmp.ne.s32.totalorder %s78, %s94
      %p96 = scmp.eq.s32.totalorder %s28, 0
      %p97 = por %p95, %p96
      %s98 = ssub.s32 %s22, %s29
      %p99 = scmp.eq.s32.totalorder %s98, 0
      %s101 = sadd.s32 %s100, 1
      %s102 = scalar_select %p99, %s100, %s101
      %p105 = pneg %p99
      %p106 = scmp.eq.s32.totalorder %s22, 1
      %p107 = por %p105, %p106
      %p108 = scmp.ne.s32.totalorder %s100, %s103
      %p109 = scmp.eq.s32.totalorder %s22, 0
      %p110 = por %p108, %p109
      %p111 = scmp.ne.s32.totalorder %s100, %s103
      %p112 = scmp.eq.s32.totalorder %s27, 1
      %p113 = por %p111, %p112
      %p114 = scmp.ne.s32.totalorder %s103, %s104
      %p115 = scmp.eq.s32.totalorder %s27, 0
      %p116 = por %p114, %p115
      %p117 = scmp.ne.s32.totalorder %s103, %s104
      %p118 = scmp.eq.s32.totalorder %s28, 1
      %p119 = por %p117, %p118
      %p121 = scmp.ne.s32.totalorder %s104, %s120
      %p122 = scmp.eq.s32.totalorder %s28, 0
      %p123 = por %p121, %p122
      %s124 = ssub.s32 %s22, %s29
      %p125 = scmp.eq.s32.totalorder %s124, 0
      %s127 = sadd.s32 %s126, 1
      %s128 = scalar_select %p125, %s126, %s127
      %p131 = pneg %p125
      %p132 = scmp.eq.s32.totalorder %s22, 1
      %p133 = por %p131, %p132
      %p134 = scmp.ne.s32.totalorder %s126, %s129
      %p135 = scmp.eq.s32.totalorder %s22, 0
      %p136 = por %p134, %p135
      %p137 = scmp.ne.s32.totalorder %s126, %s129
      %p138 = scmp.eq.s32.totalorder %s27, 1
      %p139 = por %p137, %p138
      %p140 = scmp.ne.s32.totalorder %s129, %s130
      %p141 = scmp.eq.s32.totalorder %s27, 0
      %p142 = por %p140, %p141
      %p143 = scmp.ne.s32.totalorder %s129, %s130
      %p144 = scmp.eq.s32.totalorder %s28, 1
      %p145 = por %p143, %p144
      %p147 = scmp.ne.s32.totalorder %s130, %s146
      %p148 = scmp.eq.s32.totalorder %s28, 0
      %p149 = por %p147, %p148
      %s150 = ssub.s32 %s22, %s29
      %p151 = scmp.eq.s32.totalorder %s150, 0
      %s153 = sadd.s32 %s152, 1
      %s154 = scalar_select %p151, %s152, %s153
      %p157 = pneg %p151
      %p158 = scmp.eq.s32.totalorder %s22, 1
      %p159 = por %p157, %p158
      %p160 = scmp.ne.s32.totalorder %s152, %s155
      %p161 = scmp.eq.s32.totalorder %s22, 0
      %p162 = por %p160, %p161
      %p163 = scmp.ne.s32.totalorder %s152, %s155
      %p164 = scmp.eq.s32.totalorder %s27, 1
      %p165 = por %p163, %p164
      %p166 = scmp.ne.s32.totalorder %s155, %s156
      %p167 = scmp.eq.s32.totalorder %s27, 0
      %p168 = por %p166, %p167
      %p169 = scmp.ne.s32.totalorder %s155, %s156
      %p170 = scmp.eq.s32.totalorder %s28, 1
      %p171 = por %p169, %p170
      %p173 = scmp.ne.s32.totalorder %s156, %s172
      %p174 = scmp.eq.s32.totalorder %s28, 0
      %p175 = por %p173, %p174
      %s176 = ssub.s32 %s22, %s29
      %p177 = scmp.eq.s32.totalorder %s176, 0
      %s179 = sadd.s32 %s178, 1
      %s180 = scalar_select %p177, %s178, %s179
      %p183 = pneg %p177
      %p184 = scmp.eq.s32.totalorder %s22, 1
      %p185 = por %p183, %p184
      %p186 = scmp.ne.s32.totalorder %s178, %s181
      %p187 = scmp.eq.s32.totalorder %s22, 0
      %p188 = por %p186, %p187
      %p189 = scmp.ne.s32.totalorder %s178, %s181
      %p190 = scmp.eq.s32.totalorder %s27, 1
      %p191 = por %p189, %p190
      %p192 = scmp.ne.s32.totalorder %s181, %s182
      %p193 = scmp.eq.s32.totalorder %s27, 0
      %p194 = por %p192, %p193
      %p195 = scmp.ne.s32.totalorder %s181, %s182
      %p196 = scmp.eq.s32.totalorder %s28, 1
      %p197 = por %p195, %p196
      %p199 = scmp.ne.s32.totalorder %s182, %s198
      %p200 = scmp.eq.s32.totalorder %s28, 0
      %p201 = por %p199, %p200
      %s202 = ssub.s32 %s22, %s29
      %p203 = scmp.eq.s32.totalorder %s202, 0
      %s205 = sadd.s32 %s204, 1
      %s206 = scalar_select %p203, %s204, %s205
      %p209 = pneg %p203
      %p210 = scmp.eq.s32.totalorder %s22, 1
      %p211 = por %p209, %p210
      %p212 = scmp.ne.s32.totalorder %s204, %s207
      %p213 = scmp.eq.s32.totalorder %s22, 0
      %p214 = por %p212, %p213
      %p215 = scmp.ne.s32.totalorder %s204, %s207
      %p216 = scmp.eq.s32.totalorder %s27, 1
      %p217 = por %p215, %p216
      %p218 = scmp.ne.s32.totalorder %s207, %s208
      %p219 = scmp.eq.s32.totalorder %s27, 0
      %p220 = por %p218, %p219
      %p221 = scmp.ne.s32.totalorder %s207, %s208
      %p222 = scmp.eq.s32.totalorder %s28, 1
      %p223 = por %p221, %p222
      %p225 = scmp.ne.s32.totalorder %s208, %s224
      %p226 = scmp.eq.s32.totalorder %s28, 0
      %p227 = por %p225, %p226
      %s228 = ssub.s32 %s22, %s29
      %p229 = scmp.eq.s32.totalorder %s228, 0
      %s231 = sadd.s32 %s230, 1
      %s232 = scalar_select %p229, %s230, %s231
      %p235 = pneg %p229
      %p236 = scmp.eq.s32.totalorder %s22, 1
      %p237 = por %p235, %p236
      %p238 = scmp.ne.s32.totalorder %s230, %s233
      %p239 = scmp.eq.s32.totalorder %s22, 0
      %p240 = por %p238, %p239
      %p241 = scmp.ne.s32.totalorder %s230, %s233
      %p242 = scmp.eq.s32.totalorder %s27, 1
      %p243 = por %p241, %p242
      %p244 = scmp.ne.s32.totalorder %s233, %s234
      %p245 = scmp.eq.s32.totalorder %s27, 0
      %p246 = por %p244, %p245
      %p247 = scmp.ne.s32.totalorder %s233, %s234
      %p248 = scmp.eq.s32.totalorder %s28, 1
      %p249 = por %p247, %p248
      %p251 = scmp.ne.s32.totalorder %s234, %s250
      %p252 = scmp.eq.s32.totalorder %s28, 0
      %p253 = por %p251, %p252
      %s254 = ssub.s32 %s22, %s29
      %p255 = scmp.eq.s32.totalorder %s254, 0
      %s257 = sadd.s32 %s256, 1
      %s258 = scalar_select %p255, %s256, %s257
      %p261 = pneg %p255
      %p262 = scmp.eq.s32.totalorder %s22, 1
      %p263 = por %p261, %p262
      %p264 = scmp.ne.s32.totalorder %s256, %s259
      %p265 = scmp.eq.s32.totalorder %s22, 0
      %p266 = por %p264, %p265
      %p267 = scmp.ne.s32.totalorder %s256, %s259
      %p268 = scmp.eq.s32.totalorder %s27, 1
      %p269 = por %p267, %p268
      %p270 = scmp.ne.s32.totalorder %s259, %s260
      %p271 = scmp.eq.s32.totalorder %s27, 0
      %p272 = por %p270, %p271
      %p273 = scmp.ne.s32.totalorder %s259, %s260
      %p274 = scmp.eq.s32.totalorder %s28, 1
      %p275 = por %p273, %p274
      %p277 = scmp.ne.s32.totalorder %s260, %s276
      %p278 = scmp.eq.s32.totalorder %s28, 0
      %p279 = por %p277, %p278
      %s280 = ssub.s32 %s22, %s29
      %p281 = scmp.eq.s32.totalorder %s280, 0
      %s283 = sadd.s32 %s282, 1
      %s284 = scalar_select %p281, %s282, %s283
      %p287 = pneg %p281
      %p288 = scmp.eq.s32.totalorder %s22, 1
      %p289 = por %p287, %p288
      %p290 = scmp.ne.s32.totalorder %s282, %s285
      %p291 = scmp.eq.s32.totalorder %s22, 0
      %p292 = por %p290, %p291
      %p293 = scmp.ne.s32.totalorder %s282, %s285
      %p294 = scmp.eq.s32.totalorder %s27, 1
      %p295 = por %p293, %p294
      %p296 = scmp.ne.s32.totalorder %s285, %s286
      %p297 = scmp.eq.s32.totalorder %s27, 0
      %p298 = por %p296, %p297
      %p299 = scmp.ne.s32.totalorder %s285, %s286
      %p300 = scmp.eq.s32.totalorder %s28, 1
      %p301 = por %p299, %p300
      %p303 = scmp.ne.s32.totalorder %s286, %s302
      %p304 = scmp.eq.s32.totalorder %s28, 0
      %p305 = por %p303, %p304
      %s306 = ssub.s32 %s22, %s29
      %p307 = scmp.eq.s32.totalorder %s306, 0
      %s309 = sadd.s32 %s308, 1
      %s310 = scalar_select %p307, %s308, %s309
      %p313 = pneg %p307
      %p314 = scmp.eq.s32.totalorder %s22, 1
      %p315 = por %p313, %p314
      %p316 = scmp.ne.s32.totalorder %s308, %s311
      %p317 = scmp.eq.s32.totalorder %s22, 0
      %p318 = por %p316, %p317
      %p319 = scmp.ne.s32.totalorder %s308, %s311
      %p320 = scmp.eq.s32.totalorder %s27, 1
      %p321 = por %p319, %p320
      %p322 = scmp.ne.s32.totalorder %s311, %s312
      %p323 = scmp.eq.s32.totalorder %s27, 0
      %p324 = por %p322, %p323
      %p325 = scmp.ne.s32.totalorder %s311, %s312
      %p326 = scmp.eq.s32.totalorder %s28, 1
      %p327 = por %p325, %p326
      %p329 = scmp.ne.s32.totalorder %s312, %s328
      %p330 = scmp.eq.s32.totalorder %s28, 0
      %p331 = por %p329, %p330
      %s333 = sadd.s32 %s332, 1
      %p336 = scmp.eq.s32.totalorder %s22, 1
      %p337 = scmp.ne.s32.totalorder %s332, %s334
      %p338 = scmp.eq.s32.totalorder %s22, 0
      %p339 = por %p337, %p338
      %p340 = scmp.ne.s32.totalorder %s332, %s334
      %p341 = scmp.eq.s32.totalorder %s27, 1
      %p342 = por %p340, %p341
      %p343 = scmp.ne.s32.totalorder %s334, %s335
      %p344 = scmp.eq.s32.totalorder %s27, 0
      %p345 = por %p343, %p344
      %p346 = scmp.ne.s32.totalorder %s334, %s335
      %p347 = scmp.eq.s32.totalorder %s28, 1
      %p348 = por %p346, %p347
      %p350 = scmp.ne.s32.totalorder %s335, %s349
      %p351 = scmp.eq.s32.totalorder %s28, 0
      %p352 = por %p350, %p351
      %s354 = sadd.s32 %s353, 1
      %p357 = scmp.eq.s32.totalorder %s22, 1
      %p358 = scmp.ne.s32.totalorder %s353, %s355
      %p359 = scmp.eq.s32.totalorder %s22, 0
      %p360 = por %p358, %p359
      %p361 = scmp.ne.s32.totalorder %s353, %s355
      %p362 = scmp.eq.s32.totalorder %s27, 1
      %p363 = por %p361, %p362
      %p364 = scmp.ne.s32.totalorder %s355, %s356
      %p365 = scmp.eq.s32.totalorder %s27, 0
      %p366 = por %p364, %p365
      %p367 = scmp.ne.s32.totalorder %s355, %s356
      %p368 = scmp.eq.s32.totalorder %s28, 1
      %p369 = por %p367, %p368
      %p371 = scmp.ne.s32.totalorder %s356, %s370
      %p372 = scmp.eq.s32.totalorder %s28, 0
      %p373 = por %p371, %p372
      %p374 = scmp.le.s32.totalorder 1, %s22
      %p375 = scmp.lt.s32.totalorder %s22, 3
      %p376 = pnand %p374, %p375
      %p377 = pneg %p376
      // Predicated region
      $region9: #{tpu_custom_call.1} parent=5 // pred_check
        _
      $region10: #{tpu_custom_call.1} parent=5 // pred_check_branch
        %379 = sbr.rel (%p376) target = $region12
      $region11: #{tpu_custom_call.1} parent=5 // pred_region
        %s380 = ssub.s32 %s22, 1
        // Predicated region
        $region13: #{tpu_custom_call.1} parent=11 // pred_check
          %p381 = pneg %p43
        $region14: #{tpu_custom_call.1} parent=11 // pred_check_branch
          %383 = sbr.rel (%p381) target = $region16
        $region15: #{tpu_custom_call.1} parent=11 // pred_region
          %s385 = ssub.s32 256, 256
          %386 = vsyncadd [#allocation4], %s385
          %s387 = sshll.u32 [#allocation3], 4
          %s388 = int_to_ptr.vmem [resolvable:$true] %s387
          %393 = dma.hbm_to_vmem [thread:$0]  %s0, 256, %s388, [#allocation4], 128, 128, 8
        $region16: #{tpu_custom_call.1} parent=11 // pred_fallthru
          _
        // Predicated region
        $region17: #{tpu_custom_call.1} parent=11 // pred_check
          %p394 = pneg %p64
        $region18: #{tpu_custom_call.1} parent=11 // pred_check_branch
          %396 = sbr.rel (%p394) target = $region20
        $region19: #{tpu_custom_call.1} parent=11 // pred_region
          %s398 = ssub.s32 128, 128
          %399 = vsyncadd [#allocation7], %s398
          %s401 = sshll.u32 [#allocation6], 4
          %s402 = int_to_ptr.vmem [resolvable:$true] %s401
          %404 = dma.hbm_to_vmem [thread:$0]  %s1, 128, %s402, [#allocation7]
        $region20: #{tpu_custom_call.1} parent=11 // pred_fallthru
          _
        // Predicated region
        $region21: #{tpu_custom_call.1} parent=11 // pred_check
          %p405 = pneg %p345
        $region22: #{tpu_custom_call.1} parent=11 // pred_check_branch
          %407 = sbr.rel (%p405) target = $region24
        $region23: #{tpu_custom_call.1} parent=11 // pred_region
          _
        $region24: #{tpu_custom_call.1} parent=11 // pred_fallthru
          _
      $region12: #{tpu_custom_call.1} parent=5 // pred_fallthru
        _
      %p408 = scmp.lt.s32.totalorder %s22, 2
      // Predicated region
      $region25: #{tpu_custom_call.1} parent=5 // pred_check
        %p409 = pneg %p408
      $region26: #{tpu_custom_call.1} parent=5 // pred_check_branch
        %411 = sbr.rel (%p409) target = $region28
      $region27: #{tpu_custom_call.1} parent=5 // pred_region
        // Predicated region
        $region29: #{tpu_custom_call.1} parent=27 // pred_check
          %p412 = pneg %p84
        $region30: #{tpu_custom_call.1} parent=27 // pred_check_branch
          %414 = sbr.rel (%p412) target = $region32
        $region31: #{tpu_custom_call.1} parent=27 // pred_region
          %p415 = scmp.lt.s32.totalorder %s22, 1
          %s416 = scalar_select %p415, %s22, 1
          %s417 = scalar_lea.vmem %s2, %s416
        $region32: #{tpu_custom_call.1} parent=27 // pred_fallthru
          _
        // Predicated region
        $region33: #{tpu_custom_call.1} parent=27 // pred_check
          %p418 = pneg %p110
        $region34: #{tpu_custom_call.1} parent=27 // pred_check_branch
          %420 = sbr.rel (%p418) target = $region36
        $region35: #{tpu_custom_call.1} parent=27 // pred_region
          %p421 = scmp.lt.s32.totalorder %s22, 1
          %s422 = scalar_select %p421, %s22, 1
          %s423 = smul.addr %s422, 4
          %s424 = smul.addr %s423, 4
          %s425 = scalar_lea.vmem %s3, %s424
        $region36: #{tpu_custom_call.1} parent=27 // pred_fallthru
          _
        // Predicated region
        $region37: #{tpu_custom_call.1} parent=27 // pred_check
          %p426 = pneg %p136
        $region38: #{tpu_custom_call.1} parent=27 // pred_check_branch
          %428 = sbr.rel (%p426) target = $region40
        $region39: #{tpu_custom_call.1} parent=27 // pred_region
          %p429 = scmp.lt.s32.totalorder %s22, 1
          %s430 = scalar_select %p429, %s22, 1
          %s431 = smul.addr %s430, 4
          %s432 = smul.addr %s431, 4
          %s433 = scalar_lea.vmem %s4, %s432
        $region40: #{tpu_custom_call.1} parent=27 // pred_fallthru
          _
        // Predicated region
        $region41: #{tpu_custom_call.1} parent=27 // pred_check
          %p434 = pneg %p162
        $region42: #{tpu_custom_call.1} parent=27 // pred_check_branch
          %436 = sbr.rel (%p434) target = $region44
        $region43: #{tpu_custom_call.1} parent=27 // pred_region
          %p437 = scmp.lt.s32.totalorder %s22, 1
          %s438 = scalar_select %p437, %s22, 1
          %s439 = smul.addr %s438, 4
          %s440 = smul.addr %s439, 4
          %s441 = scalar_lea.vmem %s5, %s440
        $region44: #{tpu_custom_call.1} parent=27 // pred_fallthru
          _
        // Predicated region
        $region45: #{tpu_custom_call.1} parent=27 // pred_check
          %p442 = pneg %p188
        $region46: #{tpu_custom_call.1} parent=27 // pred_check_branch
          %444 = sbr.rel (%p442) target = $region48
        $region47: #{tpu_custom_call.1} parent=27 // pred_region
          %s445 = sand.u32 %s22, 1
          %s446 = scalar_lea.sflag [#allocation4], %s445
          %s447 = sand.u32 %s178, 1
          %s448 = smul.addr %s447, 16
          %s449 = scalar_lea.vmem [#allocation8], %s448
          %s451 = ssub.s32 256, 256
          %452 = vsyncadd %s446, %s451
          %s453 = smul.addr %s22, 4
          %s454 = smul.addr %s453, 64
          %s455 = scalar_lea.hbm %s6, %s454
          %s456 = sshll.u32 %s449, 4
          %s457 = int_to_ptr.vmem [resolvable:$true] %s456
          %462 = dma.hbm_to_vmem [thread:$0]  %s455, 256, %s457, %s446, 64, 64, 4
        $region48: #{tpu_custom_call.1} parent=27 // pred_fallthru
          _
        // Predicated region
        $region49: #{tpu_custom_call.1} parent=27 // pred_check
          %p463 = pneg %p214
        $region50: #{tpu_custom_call.1} parent=27 // pred_check_branch
          %465 = sbr.rel (%p463) target = $region52
        $region51: #{tpu_custom_call.1} parent=27 // pred_region
          %p466 = scmp.lt.s32.totalorder %s22, 1
          %s467 = scalar_select %p466, %s22, 1
          %s468 = scalar_lea.vmem %s7, %s467
        $region52: #{tpu_custom_call.1} parent=27 // pred_fallthru
          _
        // Predicated region
        $region53: #{tpu_custom_call.1} parent=27 // pred_check
          %p469 = pneg %p240
        $region54: #{tpu_custom_call.1} parent=27 // pred_check_branch
          %471 = sbr.rel (%p469) target = $region56
        $region55: #{tpu_custom_call.1} parent=27 // pred_region
          %s472 = sand.u32 %s22, 1
          %s473 = scalar_lea.sflag [#allocation4], %s472
          %s474 = sand.u32 %s230, 1
          %s475 = smul.addr %s474, 16
          %s476 = scalar_lea.vmem [#allocation9], %s475
          %s478 = ssub.s32 256, 256
          %479 = vsyncadd %s473, %s478
          %s480 = smul.addr %s22, 4
          %s481 = smul.addr %s480, 64
          %s482 = scalar_lea.hbm %s8, %s481
          %s483 = sshll.u32 %s476, 4
          %s484 = int_to_ptr.vmem [resolvable:$true] %s483
          %489 = dma.hbm_to_vmem [thread:$0]  %s482, 256, %s484, %s473, 64, 64, 4
        $region56: #{tpu_custom_call.1} parent=27 // pred_fallthru
          _
        // Predicated region
        $region57: #{tpu_custom_call.1} parent=27 // pred_check
          %p490 = pneg %p266
        $region58: #{tpu_custom_call.1} parent=27 // pred_check_branch
          %492 = sbr.rel (%p490) target = $region60
        $region59: #{tpu_custom_call.1} parent=27 // pred_region
          %p493 = scmp.lt.s32.totalorder %s22, 1
          %s494 = scalar_select %p493, %s22, 1
          %s495 = scalar_lea.vmem %s9, %s494
        $region60: #{tpu_custom_call.1} parent=27 // pred_fallthru
          _
        // Predicated region
        $region61: #{tpu_custom_call.1} parent=27 // pred_check
          %p496 = pneg %p292
        $region62: #{tpu_custom_call.1} parent=27 // pred_check_branch
          %498 = sbr.rel (%p496) target = $region64
        $region63: #{tpu_custom_call.1} parent=27 // pred_region
          %p499 = scmp.lt.s32.totalorder %s22, 1
          %s500 = scalar_select %p499, %s22, 1
          %s501 = smul.addr %s500, 8
          %s502 = smul.addr %s501, 4
          %s503 = scalar_lea.vmem %s10, %s502
        $region64: #{tpu_custom_call.1} parent=27 // pred_fallthru
          _
        // Predicated region
        $region65: #{tpu_custom_call.1} parent=27 // pred_check
          %p504 = pneg %p318
        $region66: #{tpu_custom_call.1} parent=27 // pred_check_branch
          %506 = sbr.rel (%p504) target = $region68
        $region67: #{tpu_custom_call.1} parent=27 // pred_region
          %p507 = scmp.lt.s32.totalorder %s22, 1
          %s508 = scalar_select %p507, %s22, 1
          %s509 = scalar_lea.vmem %s11, %s508
        $region68: #{tpu_custom_call.1} parent=27 // pred_fallthru
          _
      $region28: #{tpu_custom_call.1} parent=5 // pred_fallthru
        _
      %p510 = scmp.le.s32.totalorder 1, %s22
      %p511 = scmp.lt.s32.totalorder %s22, 3
      %p512 = pnand %p510, %p511
      %p513 = pneg %p512
      // Predicated region
      $region69: #{tpu_custom_call.1} parent=5 // pred_check
        _
      $region70: #{tpu_custom_call.1} parent=5 // pred_check_branch
        %515 = sbr.rel (%p512) target = $region72
      $region71: #{tpu_custom_call.1} parent=5 // pred_region
        %s516 = ssub.s32 %s22, 1
        // Predicated region
        $region73: #{tpu_custom_call.1} parent=71 // pred_check
          %p517 = pneg %p43
        $region74: #{tpu_custom_call.1} parent=71 // pred_check_branch
          %519 = sbr.rel (%p517) target = $region76
        $region75: #{tpu_custom_call.1} parent=71 // pred_region
          %520 = dma.done [#allocation4], 256
        $region76: #{tpu_custom_call.1} parent=71 // pred_fallthru
          _
        // Predicated region
        $region77: #{tpu_custom_call.1} parent=71 // pred_check
          %p521 = pneg %p64
        $region78: #{tpu_custom_call.1} parent=71 // pred_check_branch
          %523 = sbr.rel (%p521) target = $region80
        $region79: #{tpu_custom_call.1} parent=71 // pred_region
          %524 = dma.done [#allocation7], 128
        $region80: #{tpu_custom_call.1} parent=71 // pred_fallthru
          _
        %s525 = sand.u32 %s27, 1
        %s526 = scalar_lea.sflag [#allocation4], %s525
        %s527 = sand.u32 %s181, 1
        %s528 = smul.addr %s527, 16
        %s529 = scalar_lea.vmem [#allocation8], %s528
        // Predicated region
        $region81: #{tpu_custom_call.1} parent=71 // pred_check
          %p530 = pneg %p194
        $region82: #{tpu_custom_call.1} parent=71 // pred_check_branch
          %532 = sbr.rel (%p530) target = $region84
        $region83: #{tpu_custom_call.1} parent=71 // pred_region
          %533 = dma.done %s526, 256
        $region84: #{tpu_custom_call.1} parent=71 // pred_fallthru
          _
        %s534 = sand.u32 %s27, 1
        %s535 = scalar_lea.sflag [#allocation4], %s534
        %s536 = sand.u32 %s233, 1
        %s537 = smul.addr %s536, 16
        %s538 = scalar_lea.vmem [#allocation9], %s537
        // Predicated region
        $region85: #{tpu_custom_call.1} parent=71 // pred_check
          %p539 = pneg %p246
        $region86: #{tpu_custom_call.1} parent=71 // pred_check_branch
          %541 = sbr.rel (%p539) target = $region88
        $region87: #{tpu_custom_call.1} parent=71 // pred_region
          %542 = dma.done %s535, 256
        $region88: #{tpu_custom_call.1} parent=71 // pred_fallthru
          _
        %p543 = pneg %p43
        %p544 = pneg %p40
        %p545 = pneg %p64
        %p546 = pneg %p61
        %p547 = scmp.lt.s32.totalorder %s27, 1
        %s548 = scalar_select %p547, %s27, 1
        %s549 = scalar_lea.vmem %s2, %s548
        %p550 = pneg %p90
        %p551 = pneg %p87
        %p552 = scmp.lt.s32.totalorder %s27, 1
        %s553 = scalar_select %p552, %s27, 1
        %s554 = smul.addr %s553, 4
        %s555 = smul.addr %s554, 4
        %s556 = scalar_lea.vmem %s3, %s555
        %p557 = pneg %p116
        %p558 = pneg %p113
        %p559 = scmp.lt.s32.totalorder %s27, 1
        %s560 = scalar_select %p559, %s27, 1
        %s561 = smul.addr %s560, 4
        %s562 = smul.addr %s561, 4
        %s563 = scalar_lea.vmem %s4, %s562
        %p564 = pneg %p142
        %p565 = pneg %p139
        %p566 = scmp.lt.s32.totalorder %s27, 1
        %s567 = scalar_select %p566, %s27, 1
        %s568 = smul.addr %s567, 4
        %s569 = smul.addr %s568, 4
        %s570 = scalar_lea.vmem %s5, %s569
        %p571 = pneg %p168
        %p572 = pneg %p165
        %s573 = sand.u32 %s27, 1
        %s574 = scalar_lea.sflag [#allocation4], %s573
        %s575 = sand.u32 %s181, 1
        %s576 = smul.addr %s575, 16
        %s577 = scalar_lea.vmem [#allocation8], %s576
        %p578 = pneg %p194
        %p579 = pneg %p191
        %p580 = scmp.lt.s32.totalorder %s27, 1
        %s581 = scalar_select %p580, %s27, 1
        %s582 = scalar_lea.vmem %s7, %s581
        %p583 = pneg %p220
        %p584 = pneg %p217
        %s585 = sand.u32 %s27, 1
        %s586 = scalar_lea.sflag [#allocation4], %s585
        %s587 = sand.u32 %s233, 1
        %s588 = smul.addr %s587, 16
        %s589 = scalar_lea.vmem [#allocation9], %s588
        %p590 = pneg %p246
        %p591 = pneg %p243
        %p592 = scmp.lt.s32.totalorder %s27, 1
        %s593 = scalar_select %p592, %s27, 1
        %s594 = scalar_lea.vmem %s9, %s593
        %p595 = pneg %p272
        %p596 = pneg %p269
        %p597 = scmp.lt.s32.totalorder %s27, 1
        %s598 = scalar_select %p597, %s27, 1
        %s599 = smul.addr %s598, 8
        %s600 = smul.addr %s599, 4
        %s601 = scalar_lea.vmem %s10, %s600
        %p602 = pneg %p298
        %p603 = pneg %p295
        %p604 = scmp.lt.s32.totalorder %s27, 1
        %s605 = scalar_select %p604, %s27, 1
        %s606 = scalar_lea.vmem %s11, %s605
        %p607 = pneg %p324
        %p608 = pneg %p321
        %p609 = pneg %p345
        %p610 = pneg %p342
        %p611 = pneg %p366
        %p612 = pneg %p363
        %p613 = scmp.lt.s32.totalorder %s27, 1
        %s614 = scalar_select %p613, %s27, 1
        %s615 = scalar_lea.vmem %s2, %s614
        %p616 = scmp.lt.s32.totalorder %s27, 1
        %s617 = scalar_select %p616, %s27, 1
        %s618 = smul.addr %s617, 4
        %s619 = smul.addr %s618, 4
        %s620 = scalar_lea.vmem %s3, %s619
        %p621 = scmp.lt.s32.totalorder %s27, 1
        %s622 = scalar_select %p621, %s27, 1
        %s623 = smul.addr %s622, 4
        %s624 = smul.addr %s623, 4
        %s625 = scalar_lea.vmem %s4, %s624
        %p626 = scmp.lt.s32.totalorder %s27, 1
        %s627 = scalar_select %p626, %s27, 1
        %s628 = smul.addr %s627, 4
        %s629 = smul.addr %s628, 4
        %s630 = scalar_lea.vmem %s5, %s629
        %p631 = scmp.lt.s32.totalorder %s27, 1
        %s632 = scalar_select %p631, %s27, 1
        %s633 = scalar_lea.vmem %s7, %s632
        %p634 = scmp.lt.s32.totalorder %s27, 1
        %s635 = scalar_select %p634, %s27, 1
        %s636 = scalar_lea.vmem %s9, %s635
        %p637 = scmp.lt.s32.totalorder %s27, 1
        %s638 = scalar_select %p637, %s27, 1
        %s639 = smul.addr %s638, 8
        %s640 = smul.addr %s639, 4
        %s641 = scalar_lea.vmem %s10, %s640
        %p642 = scmp.lt.s32.totalorder %s27, 1
        %s643 = scalar_select %p642, %s27, 1
        %s644 = scalar_lea.vmem %s11, %s643
        %p646 = scmp.eq.s32.totalorder %s27, 0
        // Predicated region
        $region89: #{tpu_custom_call.1} parent=71 // pred_check
          %p647 = pneg %p646
        $region90: #{tpu_custom_call.1} parent=71 // pred_check_branch
          %649 = sbr.rel (%p647) target = $region92
        $region91: #{tpu_custom_call.1} parent=71 // pred_region
          %v650 = vld [vmem:[#allocation3] sm:$0xff]
          %v651 = vld [vmem:[#allocation3 + $0x8] sm:$0xff]
          %vm652 = vcmask 261120
          %653 = vst.msk [vmem:[#allocation2] sm:$0xff] %vm652, %v650
          %654 = vst.msk [vmem:[#allocation2 + $0x8] sm:$0xff] %vm652, %v651
        $region92: #{tpu_custom_call.1} parent=71 // pred_fallthru
          _
        %v655 = vld [vmem:[#allocation2] sm:$0xff]
        %v656 = vld [vmem:[#allocation2 + $0x8] sm:$0xff]
        %v657 = vld [vmem:[%s615] sm:$0x1]
        %vm658 = vcmask 261120
        %v659 = vsel %vm658, %v655, 0.0
        %660 = vadd.xlane.f32.xlu0 %v659
        %v661 = vpop.xlane.xlu0 %660
        %v662 = vsel %vm658, %v656, 0.0
        %663 = vadd.xlane.f32.xlu0 %v662
        %v664 = vpop.xlane.xlu0 %663
        %v665 = vrcp.pop 32.0
        %v666 = vmul.f32 %v661, %v665
        %v667 = vmul.f32 %v664, %v665
        %v668 = vsub.f32 %v655, %v666
        %v669 = vsub.f32 %v656, %v667
        %v670 = vmul.f32 %v668, %v668
        %v671 = vmul.f32 %v669, %v669
        %v672 = vsel %vm658, %v670, 0.0
        %673 = vadd.xlane.f32.xlu0 %v672
        %v674 = vpop.xlane.xlu0 %673
        %v675 = vsel %vm658, %v671, 0.0
        %676 = vadd.xlane.f32.xlu0 %v675
        %v677 = vpop.xlane.xlu0 %676
        %v678 = vmul.f32 %v674, %v665
        %v679 = vmul.f32 %v677, %v665
        %v680 = vadd.f32 %v678, 1e-05
        %v681 = vadd.f32 %v679, 1e-05
        %v682 = vrsqrt.pop %v680
        %v683 = vrsqrt.pop %v681
        %v684 = vmul.f32 %v668, %v682
        %v685 = vmul.f32 %v669, %v683
        %v687 = vlaneseq
        %v688 = vshrl.u32 %v687, 7
        %v689 = vsub.s32 0, %v688
        %v690 = vrot.slane %v657, %v689
        %v692 = vmul.f32 %v684, %v690
        %v693 = vmul.f32 %v685, %v690
        %v694 = vpack.c.bf16 %v693, %v692
        %v695 = vld [vmem:[%s620] sm:$0xf]
        %v696 = vld [vmem:[%s620 + $0x4] sm:$0xf]
        %v697 = vld [vmem:[%s620 + $0x8] sm:$0xf]
        %v698 = vld [vmem:[%s620 + $0xc] sm:$0xf]
        %v703 = vunpack.c.l.b16 %v695
        %v704 = vunpack.c.l.b16 %v696
        %v705 = vunpack.c.l.b16 %v697
        %v706 = vunpack.c.l.b16 %v698
        %v707 = vpack.c.b16 %v704, %v703
        %v708 = vpack.c.b16 %v706, %v705
        %v712 = vsel %vm658, %v694, 0
        %714 = vmatprep.subr.bf16.mxu0 0
        %715 = vmatpush1.bf16.msra.mxu0 0
        %716 = vmatprep.subr.bf16.mxu0 0
        %717 = vmatpush1.bf16.msra.mxu0 0
        %718 = vmatprep.subr.bf16.mxu0 0
        %719 = vmatpush1.bf16.msra.mxu0 0
        %720 = vmatprep.subr.bf16.mxu0 0
        %721 = vmatpush1.bf16.msra.mxu0 0
        %722 = vmatprep.subr.bf16.mxu0 0
        %723 = vmatpush1.bf16.msra.mxu0 0
        %724 = vmatprep.subr.bf16.mxu0 0
        %725 = vmatpush1.bf16.msra.mxu0 0
        %726 = vmatprep.subr.bf16.mxu0 0
        %727 = vmatpush1.bf16.msra.mxu0 %v708
        %728 = vmatprep.subr.bf16.mxu0 0
        %729 = vmatpush1.bf16.msra.mxu0 %v707
        %730 = vmatprep.subr.bf16.mxu0 0
        %731 = vmatpush2.bf16.msra.mxu0 0
        %732 = vmatprep.subr.bf16.mxu0 0
        %733 = vmatpush2.bf16.msra.mxu0 0
        %734 = vmatprep.subr.bf16.mxu0 0
        %735 = vmatpush2.bf16.msra.mxu0 0
        %736 = vmatprep.subr.bf16.mxu0 0
        %737 = vmatpush2.bf16.msra.mxu0 0
        %738 = vmatprep.subr.bf16.mxu0 0
        %739 = vmatpush2.bf16.msra.mxu0 0
        %740 = vmatprep.subr.bf16.mxu0 0
        %741 = vmatpush2.bf16.msra.mxu0 0
        %742 = vmatprep.subr.bf16.mxu0 0
        %743 = vmatpush2.bf16.msra.mxu0 0
        %744 = vmatprep.subr.bf16.mxu0 0
        %745 = vmatpush2.bf16.msra.mxu0 0
        %746 = vmatprep.mubr.bf16.mxu0 0
        %747 = vmatmul.mubr.bf16.gmra.mxu0 %v712
        %v748 = vpop.f32.mrf.mxu0
        %v749 = vadd.f32 0.0, %v748
        %v750 = vpop.f32.mrf.mxu0
        %v751 = vpop.f32.mrf.mxu0
        %v752 = vadd.f32 0.0, %v751
        %v753 = vpop.f32.mrf.mxu0
        %754 = vdwg.mxu0
        %v755 = vld [vmem:[%s625] sm:$0xf]
        %v756 = vld [vmem:[%s625 + $0x4] sm:$0xf]
        %v757 = vld [vmem:[%s625 + $0x8] sm:$0xf]
        %v758 = vld [vmem:[%s625 + $0xc] sm:$0xf]
        %v763 = vunpack.c.l.b16 %v755
        %v764 = vunpack.c.l.b16 %v756
        %v765 = vunpack.c.l.b16 %v757
        %v766 = vunpack.c.l.b16 %v758
        %v767 = vpack.c.b16 %v764, %v763
        %v768 = vpack.c.b16 %v766, %v765
        %771 = vmatprep.subr.bf16.mxu0 0
        %772 = vmatpush1.bf16.msra.mxu0 0
        %773 = vmatprep.subr.bf16.mxu0 0
        %774 = vmatpush1.bf16.msra.mxu0 0
        %775 = vmatprep.subr.bf16.mxu0 0
        %776 = vmatpush1.bf16.msra.mxu0 0
        %777 = vmatprep.subr.bf16.mxu0 0
        %778 = vmatpush1.bf16.msra.mxu0 0
        %779 = vmatprep.subr.bf16.mxu0 0
        %780 = vmatpush1.bf16.msra.mxu0 0
        %781 = vmatprep.subr.bf16.mxu0 0
        %782 = vmatpush1.bf16.msra.mxu0 0
        %783 = vmatprep.subr.bf16.mxu0 0
        %784 = vmatpush1.bf16.msra.mxu0 %v768
        %785 = vmatprep.subr.bf16.mxu0 0
        %786 = vmatpush1.bf16.msra.mxu0 %v767
        %787 = vmatprep.subr.bf16.mxu0 0
        %788 = vmatpush2.bf16.msra.mxu0 0
        %789 = vmatprep.subr.bf16.mxu0 0
        %790 = vmatpush2.bf16.msra.mxu0 0
        %791 = vmatprep.subr.bf16.mxu0 0
        %792 = vmatpush2.bf16.msra.mxu0 0
        %793 = vmatprep.subr.bf16.mxu0 0
        %794 = vmatpush2.bf16.msra.mxu0 0
        %795 = vmatprep.subr.bf16.mxu0 0
        %796 = vmatpush2.bf16.msra.mxu0 0
        %797 = vmatprep.subr.bf16.mxu0 0
        %798 = vmatpush2.bf16.msra.mxu0 0
        %799 = vmatprep.subr.bf16.mxu0 0
        %800 = vmatpush2.bf16.msra.mxu0 0
        %801 = vmatprep.subr.bf16.mxu0 0
        %802 = vmatpush2.bf16.msra.mxu0 0
        %803 = vmatprep.mubr.bf16.mxu0 0
        %804 = vmatmul.mubr.bf16.gmra.mxu0 %v712
        %v805 = vpop.f32.mrf.mxu0
        %v806 = vadd.f32 0.0, %v805
        %v807 = vpop.f32.mrf.mxu0
        %v808 = vpop.f32.mrf.mxu0
        %v809 = vadd.f32 0.0, %v808
        %v810 = vpop.f32.mrf.mxu0
        %811 = vdwg.mxu0
        %v812 = vld [vmem:[%s630] sm:$0xf]
        %v813 = vld [vmem:[%s630 + $0x4] sm:$0xf]
        %v814 = vld [vmem:[%s630 + $0x8] sm:$0xf]
        %v815 = vld [vmem:[%s630 + $0xc] sm:$0xf]
        %v820 = vunpack.c.l.b16 %v812
        %v821 = vunpack.c.l.b16 %v813
        %v822 = vunpack.c.l.b16 %v814
        %v823 = vunpack.c.l.b16 %v815
        %v824 = vpack.c.b16 %v821, %v820
        %v825 = vpack.c.b16 %v823, %v822
        %828 = vmatprep.subr.bf16.mxu0 0
        %829 = vmatpush1.bf16.msra.mxu0 0
        %830 = vmatprep.subr.bf16.mxu0 0
        %831 = vmatpush1.bf16.msra.mxu0 0
        %832 = vmatprep.subr.bf16.mxu0 0
        %833 = vmatpush1.bf16.msra.mxu0 0
        %834 = vmatprep.subr.bf16.mxu0 0
        %835 = vmatpush1.bf16.msra.mxu0 0
        %836 = vmatprep.subr.bf16.mxu0 0
        %837 = vmatpush1.bf16.msra.mxu0 0
        %838 = vmatprep.subr.bf16.mxu0 0
        %839 = vmatpush1.bf16.msra.mxu0 0
        %840 = vmatprep.subr.bf16.mxu0 0
        %841 = vmatpush1.bf16.msra.mxu0 %v825
        %842 = vmatprep.subr.bf16.mxu0 0
        %843 = vmatpush1.bf16.msra.mxu0 %v824
        %844 = vmatprep.subr.bf16.mxu0 0
        %845 = vmatpush2.bf16.msra.mxu0 0
        %846 = vmatprep.subr.bf16.mxu0 0
        %847 = vmatpush2.bf16.msra.mxu0 0
        %848 = vmatprep.subr.bf16.mxu0 0
        %849 = vmatpush2.bf16.msra.mxu0 0
        %850 = vmatprep.subr.bf16.mxu0 0
        %851 = vmatpush2.bf16.msra.mxu0 0
        %852 = vmatprep.subr.bf16.mxu0 0
        %853 = vmatpush2.bf16.msra.mxu0 0
        %854 = vmatprep.subr.bf16.mxu0 0
        %855 = vmatpush2.bf16.msra.mxu0 0
        %856 = vmatprep.subr.bf16.mxu0 0
        %857 = vmatpush2.bf16.msra.mxu0 0
        %858 = vmatprep.subr.bf16.mxu0 0
        %859 = vmatpush2.bf16.msra.mxu0 0
        %860 = vmatprep.mubr.bf16.mxu0 0
        %861 = vmatmul.mubr.bf16.gmra.mxu0 %v712
        %v862 = vpop.f32.mrf.mxu0
        %v863 = vadd.f32 0.0, %v862
        %v864 = vpop.f32.mrf.mxu0
        %v865 = vpop.f32.mrf.mxu0
        %v866 = vadd.f32 0.0, %v865
        %v867 = vpop.f32.mrf.mxu0
        %868 = vdwg.mxu0
        %v869 = vld [vmem:[#allocation6] sm:$0xff]
        %vm870 = vcmp.gt.f32.partialorder %v869, 0.0
        %v871 = vsel %vm870, 1, 0
        %vm872 = vcmp.eq.s32.totalorder %v871, 1
        %v873 = vpack.c.bf16 %v749, %v749
        %v874 = vpack.c.bf16 %v752, %v752
        %v875 = vpack.c.bf16 %v806, %v806
        %v876 = vpack.c.bf16 %v809, %v809
        %v877 = vpack.c.bf16 %v863, %v863
        %v878 = vpack.c.bf16 %v866, %v866
        %vm879 = vcmask 64512
        %v881 = vsel %vm879, %v873, 0
        %v884 = vsel %vm879, %v875, 0
        %886 = vmatprep.subr.bf16.mxu0 0
        %887 = vmatpush1.bf16.xpose.msra.mxu0 0
        %888 = vmatprep.subr.bf16.mxu0 0
        %889 = vmatpush1.bf16.xpose.msra.mxu0 0
        %890 = vmatprep.subr.bf16.mxu0 0
        %891 = vmatpush1.bf16.xpose.msra.mxu0 0
        %892 = vmatprep.subr.bf16.mxu0 0
        %893 = vmatpush1.bf16.xpose.msra.mxu0 0
        %894 = vmatprep.subr.bf16.mxu0 0
        %895 = vmatpush1.bf16.xpose.msra.mxu0 0
        %896 = vmatprep.subr.bf16.mxu0 0
        %897 = vmatpush1.bf16.xpose.msra.mxu0 0
        %898 = vmatprep.subr.bf16.mxu0 0
        %899 = vmatpush1.bf16.xpose.msra.mxu0 0
        %900 = vmatprep.subr.bf16.mxu0 0
        %901 = vmatpush1.bf16.xpose.msra.mxu0 %v884
        %902 = vmatprep.subr.bf16.mxu0 0
        %903 = vmatpush2.bf16.xpose.msra.mxu0 0
        %904 = vmatprep.subr.bf16.mxu0 0
        %905 = vmatpush2.bf16.xpose.msra.mxu0 0
        %906 = vmatprep.subr.bf16.mxu0 0
        %907 = vmatpush2.bf16.xpose.msra.mxu0 0
        %908 = vmatprep.subr.bf16.mxu0 0
        %909 = vmatpush2.bf16.xpose.msra.mxu0 0
        %910 = vmatprep.subr.bf16.mxu0 0
        %911 = vmatpush2.bf16.xpose.msra.mxu0 0
        %912 = vmatprep.subr.bf16.mxu0 0
        %913 = vmatpush2.bf16.xpose.msra.mxu0 0
        %914 = vmatprep.subr.bf16.mxu0 0
        %915 = vmatpush2.bf16.xpose.msra.mxu0 0
        %916 = vmatprep.subr.bf16.mxu0 0
        %917 = vmatpush2.bf16.xpose.msra.mxu0 0
        %918 = vmatprep.mubr.bf16.mxu0 0
        %919 = vmatmul.mubr.bf16.gmra.mxu0 %v881
        %v920 = vpop.f32.mrf.mxu0
        %v921 = vadd.f32 0.0, %v920
        %v922 = vpop.f32.mrf.mxu0
        %v923 = vpop.f32.mrf.mxu0
        %v924 = vpop.f32.mrf.mxu0
        %925 = vdwg.mxu0
        %v927 = vsel %vm879, %v874, 0
        %v930 = vsel %vm879, %v876, 0
        %932 = vmatprep.subr.bf16.mxu0 0
        %933 = vmatpush1.bf16.xpose.msra.mxu0 0
        %934 = vmatprep.subr.bf16.mxu0 0
        %935 = vmatpush1.bf16.xpose.msra.mxu0 0
        %936 = vmatprep.subr.bf16.mxu0 0
        %937 = vmatpush1.bf16.xpose.msra.mxu0 0
        %938 = vmatprep.subr.bf16.mxu0 0
        %939 = vmatpush1.bf16.xpose.msra.mxu0 0
        %940 = vmatprep.subr.bf16.mxu0 0
        %941 = vmatpush1.bf16.xpose.msra.mxu0 0
        %942 = vmatprep.subr.bf16.mxu0 0
        %943 = vmatpush1.bf16.xpose.msra.mxu0 0
        %944 = vmatprep.subr.bf16.mxu0 0
        %945 = vmatpush1.bf16.xpose.msra.mxu0 0
        %946 = vmatprep.subr.bf16.mxu0 0
        %947 = vmatpush1.bf16.xpose.msra.mxu0 %v930
        %948 = vmatprep.subr.bf16.mxu0 0
        %949 = vmatpush2.bf16.xpose.msra.mxu0 0
        %950 = vmatprep.subr.bf16.mxu0 0
        %951 = vmatpush2.bf16.xpose.msra.mxu0 0
        %952 = vmatprep.subr.bf16.mxu0 0
        %953 = vmatpush2.bf16.xpose.msra.mxu0 0
        %954 = vmatprep.subr.bf16.mxu0 0
        %955 = vmatpush2.bf16.xpose.msra.mxu0 0
        %956 = vmatprep.subr.bf16.mxu0 0
        %957 = vmatpush2.bf16.xpose.msra.mxu0 0
        %958 = vmatprep.subr.bf16.mxu0 0
        %959 = vmatpush2.bf16.xpose.msra.mxu0 0
        %960 = vmatprep.subr.bf16.mxu0 0
        %961 = vmatpush2.bf16.xpose.msra.mxu0 0
        %962 = vmatprep.subr.bf16.mxu0 0
        %963 = vmatpush2.bf16.xpose.msra.mxu0 0
        %964 = vmatprep.mubr.bf16.mxu0 0
        %965 = vmatmul.mubr.bf16.gmra.mxu0 %v927
        %v966 = vpop.f32.mrf.mxu0
        %v967 = vadd.f32 0.0, %v966
        %v968 = vpop.f32.mrf.mxu0
        %v969 = vpop.f32.mrf.mxu0
        %v970 = vpop.f32.mrf.mxu0
        %971 = vdwg.mxu0
        %v972 = vmul.f32 %v921, 0.35355338
        %v973 = vmul.f32 %v967, 0.35355338
        %v974 = vsel %vm872, %v972, -3.4028235e+38
        %v975 = vsel %vm872, %v973, -3.4028235e+38
        %v976 = vsel %vm879, %v974, -inf
        %977 = vmax.xlane.f32.xlu0 %v976
        %v978 = vpop.xlane.xlu0 %977
        %v979 = vsel %vm879, %v975, -inf
        %980 = vmax.xlane.f32.xlu0 %v979
        %v981 = vpop.xlane.xlu0 %980
        %v982 = vsub.f32 %v974, %v978
        %v983 = vsub.f32 %v975, %v981
        %v984 = vmul.f32 %v982, 1.442695
        %v985 = vpow.pop %v984
        %v986 = vmul.f32 %v983, 1.442695
        %v987 = vpow.pop %v986
        %v988 = vsel %vm879, %v985, 0.0
        %989 = vadd.xlane.f32.xlu0 %v988
        %v990 = vpop.xlane.xlu0 %989
        %v991 = vsel %vm879, %v987, 0.0
        %992 = vadd.xlane.f32.xlu0 %v991
        %v993 = vpop.xlane.xlu0 %992
        %v994 = vrcp.pop %v990
        %v995 = vrcp.pop %v993
        %v996 = vmul.f32 %v985, %v994
        %v997 = vmul.f32 %v987, %v995
        %v998 = vpack.c.bf16 %v996, %v996
        %v999 = vpack.c.bf16 %v997, %v997
        %v1001 = vsel %vm879, %v998, 0
        %vm1003 = vcmask 1043456
        %v1005 = vsel %vm1003, %v877, 0
        %1007 = vmatprep.subr.bf16.mxu0 0
        %1008 = vmatpush1.bf16.msra.mxu0 0
        %1009 = vmatprep.subr.bf16.mxu0 0
        %1010 = vmatpush1.bf16.msra.mxu0 0
        %1011 = vmatprep.subr.bf16.mxu0 0
        %1012 = vmatpush1.bf16.msra.mxu0 0
        %1013 = vmatprep.subr.bf16.mxu0 0
        %1014 = vmatpush1.bf16.msra.mxu0 0
        %1015 = vmatprep.subr.bf16.mxu0 0
        %1016 = vmatpush1.bf16.msra.mxu0 0
        %1017 = vmatprep.subr.bf16.mxu0 0
        %1018 = vmatpush1.bf16.msra.mxu0 0
        %1019 = vmatprep.subr.bf16.mxu0 0
        %1020 = vmatpush1.bf16.msra.mxu0 0
        %1021 = vmatprep.subr.bf16.mxu0 0
        %1022 = vmatpush1.bf16.msra.mxu0 %v1005
        %1023 = vmatprep.subr.bf16.mxu0 0
        %1024 = vmatpush2.bf16.msra.mxu0 0
        %1025 = vmatprep.subr.bf16.mxu0 0
        %1026 = vmatpush2.bf16.msra.mxu0 0
        %1027 = vmatprep.subr.bf16.mxu0 0
        %1028 = vmatpush2.bf16.msra.mxu0 0
        %1029 = vmatprep.subr.bf16.mxu0 0
        %1030 = vmatpush2.bf16.msra.mxu0 0
        %1031 = vmatprep.subr.bf16.mxu0 0
        %1032 = vmatpush2.bf16.msra.mxu0 0
        %1033 = vmatprep.subr.bf16.mxu0 0
        %1034 = vmatpush2.bf16.msra.mxu0 0
        %1035 = vmatprep.subr.bf16.mxu0 0
        %1036 = vmatpush2.bf16.msra.mxu0 0
        %1037 = vmatprep.subr.bf16.mxu0 0
        %1038 = vmatpush2.bf16.msra.mxu0 0
        %1039 = vmatprep.mubr.bf16.mxu0 0
        %1040 = vmatmul.mubr.bf16.gmra.mxu0 %v1001
        %v1041 = vpop.f32.mrf.mxu0
        %v1042 = vadd.f32 0.0, %v1041
        %v1043 = vpop.f32.mrf.mxu0
        %v1044 = vpop.f32.mrf.mxu0
        %v1045 = vpop.f32.mrf.mxu0
        %1046 = vdwg.mxu0
        %v1048 = vsel %vm879, %v999, 0
        %v1051 = vsel %vm1003, %v878, 0
        %1053 = vmatprep.subr.bf16.mxu0 0
        %1054 = vmatpush1.bf16.msra.mxu0 0
        %1055 = vmatprep.subr.bf16.mxu0 0
        %1056 = vmatpush1.bf16.msra.mxu0 0
        %1057 = vmatprep.subr.bf16.mxu0 0
        %1058 = vmatpush1.bf16.msra.mxu0 0
        %1059 = vmatprep.subr.bf16.mxu0 0
        %1060 = vmatpush1.bf16.msra.mxu0 0
        %1061 = vmatprep.subr.bf16.mxu0 0
        %1062 = vmatpush1.bf16.msra.mxu0 0
        %1063 = vmatprep.subr.bf16.mxu0 0
        %1064 = vmatpush1.bf16.msra.mxu0 0
        %1065 = vmatprep.subr.bf16.mxu0 0
        %1066 = vmatpush1.bf16.msra.mxu0 0
        %1067 = vmatprep.subr.bf16.mxu0 0
        %1068 = vmatpush1.bf16.msra.mxu0 %v1051
        %1069 = vmatprep.subr.bf16.mxu0 0
        %1070 = vmatpush2.bf16.msra.mxu0 0
        %1071 = vmatprep.subr.bf16.mxu0 0
        %1072 = vmatpush2.bf16.msra.mxu0 0
        %1073 = vmatprep.subr.bf16.mxu0 0
        %1074 = vmatpush2.bf16.msra.mxu0 0
        %1075 = vmatprep.subr.bf16.mxu0 0
        %1076 = vmatpush2.bf16.msra.mxu0 0
        %1077 = vmatprep.subr.bf16.mxu0 0
        %1078 = vmatpush2.bf16.msra.mxu0 0
        %1079 = vmatprep.subr.bf16.mxu0 0
        %1080 = vmatpush2.bf16.msra.mxu0 0
        %1081 = vmatprep.subr.bf16.mxu0 0
        %1082 = vmatpush2.bf16.msra.mxu0 0
        %1083 = vmatprep.subr.bf16.mxu0 0
        %1084 = vmatpush2.bf16.msra.mxu0 0
        %1085 = vmatprep.mubr.bf16.mxu0 0
        %1086 = vmatmul.mubr.bf16.gmra.mxu0 %v1048
        %v1087 = vpop.f32.mrf.mxu0
        %v1088 = vadd.f32 0.0, %v1087
        %v1089 = vpop.f32.mrf.mxu0
        %v1090 = vpop.f32.mrf.mxu0
        %v1091 = vpop.f32.mrf.mxu0
        %1092 = vdwg.mxu0
        %v1093 = vpack.c.bf16 %v1088, %v1042
        %v1094 = vld [vmem:[%s529] sm:$0xf]
        %1096 = vrot.lane.b32.xlu0 %v873, 120
        %v1097 = vpop.permute.xlu0 %1096
        %1099 = vrot.lane.b32.xlu0 %v875, 120
        %v1100 = vpop.permute.xlu0 %1099
        %v1102 = vsel %vm879, %v1097, 0
        %v1105 = vsel %vm879, %v1100, 0
        %1107 = vmatprep.subr.bf16.mxu0 0
        %1108 = vmatpush1.bf16.xpose.msra.mxu0 0
        %1109 = vmatprep.subr.bf16.mxu0 0
        %1110 = vmatpush1.bf16.xpose.msra.mxu0 0
        %1111 = vmatprep.subr.bf16.mxu0 0
        %1112 = vmatpush1.bf16.xpose.msra.mxu0 0
        %1113 = vmatprep.subr.bf16.mxu0 0
        %1114 = vmatpush1.bf16.xpose.msra.mxu0 0
        %1115 = vmatprep.subr.bf16.mxu0 0
        %1116 = vmatpush1.bf16.xpose.msra.mxu0 0
        %1117 = vmatprep.subr.bf16.mxu0 0
        %1118 = vmatpush1.bf16.xpose.msra.mxu0 0
        %1119 = vmatprep.subr.bf16.mxu0 0
        %1120 = vmatpush1.bf16.xpose.msra.mxu0 0
        %1121 = vmatprep.subr.bf16.mxu0 0
        %1122 = vmatpush1.bf16.xpose.msra.mxu0 %v1105
        %1123 = vmatprep.subr.bf16.mxu0 0
        %1124 = vmatpush2.bf16.xpose.msra.mxu0 0
        %1125 = vmatprep.subr.bf16.mxu0 0
        %1126 = vmatpush2.bf16.xpose.msra.mxu0 0
        %1127 = vmatprep.subr.bf16.mxu0 0
        %1128 = vmatpush2.bf16.xpose.msra.mxu0 0
        %1129 = vmatprep.subr.bf16.mxu0 0
        %1130 = vmatpush2.bf16.xpose.msra.mxu0 0
        %1131 = vmatprep.subr.bf16.mxu0 0
        %1132 = vmatpush2.bf16.xpose.msra.mxu0 0
        %1133 = vmatprep.subr.bf16.mxu0 0
        %1134 = vmatpush2.bf16.xpose.msra.mxu0 0
        %1135 = vmatprep.subr.bf16.mxu0 0
        %1136 = vmatpush2.bf16.xpose.msra.mxu0 0
        %1137 = vmatprep.subr.bf16.mxu0 0
        %1138 = vmatpush2.bf16.xpose.msra.mxu0 0
        %1139 = vmatprep.mubr.bf16.mxu0 0
        %1140 = vmatmul.mubr.bf16.gmra.mxu0 %v1102
        %v1141 = vpop.f32.mrf.mxu0
        %v1142 = vadd.f32 0.0, %v1141
        %v1143 = vpop.f32.mrf.mxu0
        %v1144 = vpop.f32.mrf.mxu0
        %v1145 = vpop.f32.mrf.mxu0
        %1146 = vdwg.mxu0
        %1148 = vrot.lane.b32.xlu0 %v874, 120
        %v1149 = vpop.permute.xlu0 %1148
        %1151 = vrot.lane.b32.xlu0 %v876, 120
        %v1152 = vpop.permute.xlu0 %1151
        %v1154 = vsel %vm879, %v1149, 0
        %v1157 = vsel %vm879, %v1152, 0
        %1159 = vmatprep.subr.bf16.mxu0 0
        %1160 = vmatpush1.bf16.xpose.msra.mxu0 0
        %1161 = vmatprep.subr.bf16.mxu0 0
        %1162 = vmatpush1.bf16.xpose.msra.mxu0 0
        %1163 = vmatprep.subr.bf16.mxu0 0
        %1164 = vmatpush1.bf16.xpose.msra.mxu0 0
        %1165 = vmatprep.subr.bf16.mxu0 0
        %1166 = vmatpush1.bf16.xpose.msra.mxu0 0
        %1167 = vmatprep.subr.bf16.mxu0 0
        %1168 = vmatpush1.bf16.xpose.msra.mxu0 0
        %1169 = vmatprep.subr.bf16.mxu0 0
        %1170 = vmatpush1.bf16.xpose.msra.mxu0 0
        %1171 = vmatprep.subr.bf16.mxu0 0
        %1172 = vmatpush1.bf16.xpose.msra.mxu0 0
        %1173 = vmatprep.subr.bf16.mxu0 0
        %1174 = vmatpush1.bf16.xpose.msra.mxu0 %v1157
        %1175 = vmatprep.subr.bf16.mxu0 0
        %1176 = vmatpush2.bf16.xpose.msra.mxu0 0
        %1177 = vmatprep.subr.bf16.mxu0 0
        %1178 = vmatpush2.bf16.xpose.msra.mxu0 0
        %1179 = vmatprep.subr.bf16.mxu0 0
        %1180 = vmatpush2.bf16.xpose.msra.mxu0 0
        %1181 = vmatprep.subr.bf16.mxu0 0
        %1182 = vmatpush2.bf16.xpose.msra.mxu0 0
        %1183 = vmatprep.subr.bf16.mxu0 0
        %1184 = vmatpush2.bf16.xpose.msra.mxu0 0
        %1185 = vmatprep.subr.bf16.mxu0 0
        %1186 = vmatpush2.bf16.xpose.msra.mxu0 0
        %1187 = vmatprep.subr.bf16.mxu0 0
        %1188 = vmatpush2.bf16.xpose.msra.mxu0 0
        %1189 = vmatprep.subr.bf16.mxu0 0
        %1190 = vmatpush2.bf16.xpose.msra.mxu0 0
        %1191 = vmatprep.mubr.bf16.mxu0 0
        %1192 = vmatmul.mubr.bf16.gmra.mxu0 %v1154
        %v1193 = vpop.f32.mrf.mxu0
        %v1194 = vadd.f32 0.0, %v1193
        %v1195 = vpop.f32.mrf.mxu0
        %v1196 = vpop.f32.mrf.mxu0
        %v1197 = vpop.f32.mrf.mxu0
        %1198 = vdwg.mxu0
        %v1199 = vmul.f32 %v1142, 0.35355338
        %v1200 = vmul.f32 %v1194, 0.35355338
        %v1201 = vsel %vm872, %v1199, -3.4028235e+38
        %v1202 = vsel %vm872, %v1200, -3.4028235e+38
        %v1203 = vsel %vm879, %v1201, -inf
        %1204 = vmax.xlane.f32.xlu0 %v1203
        %v1205 = vpop.xlane.xlu0 %1204
        %v1206 = vsel %vm879, %v1202, -inf
        %1207 = vmax.xlane.f32.xlu0 %v1206
        %v1208 = vpop.xlane.xlu0 %1207
        %v1209 = vsub.f32 %v1201, %v1205
        %v1210 = vsub.f32 %v1202, %v1208
        %v1211 = vmul.f32 %v1209, 1.442695
        %v1212 = vpow.pop %v1211
        %v1213 = vmul.f32 %v1210, 1.442695
        %v1214 = vpow.pop %v1213
        %v1215 = vsel %vm879, %v1212, 0.0
        %1216 = vadd.xlane.f32.xlu0 %v1215
        %v1217 = vpop.xlane.xlu0 %1216
        %v1218 = vsel %vm879, %v1214, 0.0
        %1219 = vadd.xlane.f32.xlu0 %v1218
        %v1220 = vpop.xlane.xlu0 %1219
        %v1221 = vrcp.pop %v1217
        %v1222 = vrcp.pop %v1220
        %v1223 = vmul.f32 %v1212, %v1221
        %v1224 = vmul.f32 %v1214, %v1222
        %v1225 = vpack.c.bf16 %v1223, %v1223
        %v1226 = vpack.c.bf16 %v1224, %v1224
        %1228 = vrot.lane.b32.xlu0 %v877, 120
        %v1229 = vpop.permute.xlu0 %1228
        %v1231 = vsel %vm879, %v1225, 0
        %v1234 = vsel %vm1003, %v1229, 0
        %1236 = vmatprep.subr.bf16.mxu0 0
        %1237 = vmatpush1.bf16.msra.mxu0 0
        %1238 = vmatprep.subr.bf16.mxu0 0
        %1239 = vmatpush1.bf16.msra.mxu0 0
        %1240 = vmatprep.subr.bf16.mxu0 0
        %1241 = vmatpush1.bf16.msra.mxu0 0
        %1242 = vmatprep.subr.bf16.mxu0 0
        %1243 = vmatpush1.bf16.msra.mxu0 0
        %1244 = vmatprep.subr.bf16.mxu0 0
        %1245 = vmatpush1.bf16.msra.mxu0 0
        %1246 = vmatprep.subr.bf16.mxu0 0
        %1247 = vmatpush1.bf16.msra.mxu0 0
        %1248 = vmatprep.subr.bf16.mxu0 0
        %1249 = vmatpush1.bf16.msra.mxu0 0
        %1250 = vmatprep.subr.bf16.mxu0 0
        %1251 = vmatpush1.bf16.msra.mxu0 %v1234
        %1252 = vmatprep.subr.bf16.mxu0 0
        %1253 = vmatpush2.bf16.msra.mxu0 0
        %1254 = vmatprep.subr.bf16.mxu0 0
        %1255 = vmatpush2.bf16.msra.mxu0 0
        %1256 = vmatprep.subr.bf16.mxu0 0
        %1257 = vmatpush2.bf16.msra.mxu0 0
        %1258 = vmatprep.subr.bf16.mxu0 0
        %1259 = vmatpush2.bf16.msra.mxu0 0
        %1260 = vmatprep.subr.bf16.mxu0 0
        %1261 = vmatpush2.bf16.msra.mxu0 0
        %1262 = vmatprep.subr.bf16.mxu0 0
        %1263 = vmatpush2.bf16.msra.mxu0 0
        %1264 = vmatprep.subr.bf16.mxu0 0
        %1265 = vmatpush2.bf16.msra.mxu0 0
        %1266 = vmatprep.subr.bf16.mxu0 0
        %1267 = vmatpush2.bf16.msra.mxu0 0
        %1268 = vmatprep.mubr.bf16.mxu0 0
        %1269 = vmatmul.mubr.bf16.gmra.mxu0 %v1231
        %v1270 = vpop.f32.mrf.mxu0
        %v1271 = vadd.f32 0.0, %v1270
        %v1272 = vpop.f32.mrf.mxu0
        %v1273 = vpop.f32.mrf.mxu0
        %v1274 = vpop.f32.mrf.mxu0
        %1275 = vdwg.mxu0
        %1277 = vrot.lane.b32.xlu0 %v878, 120
        %v1278 = vpop.permute.xlu0 %1277
        %v1280 = vsel %vm879, %v1226, 0
        %v1283 = vsel %vm1003, %v1278, 0
        %1285 = vmatprep.subr.bf16.mxu0 0
        %1286 = vmatpush1.bf16.msra.mxu0 0
        %1287 = vmatprep.subr.bf16.mxu0 0
        %1288 = vmatpush1.bf16.msra.mxu0 0
        %1289 = vmatprep.subr.bf16.mxu0 0
        %1290 = vmatpush1.bf16.msra.mxu0 0
        %1291 = vmatprep.subr.bf16.mxu0 0
        %1292 = vmatpush1.bf16.msra.mxu0 0
        %1293 = vmatprep.subr.bf16.mxu0 0
        %1294 = vmatpush1.bf16.msra.mxu0 0
        %1295 = vmatprep.subr.bf16.mxu0 0
        %1296 = vmatpush1.bf16.msra.mxu0 0
        %1297 = vmatprep.subr.bf16.mxu0 0
        %1298 = vmatpush1.bf16.msra.mxu0 0
        %1299 = vmatprep.subr.bf16.mxu0 0
        %1300 = vmatpush1.bf16.msra.mxu0 %v1283
        %1301 = vmatprep.subr.bf16.mxu0 0
        %1302 = vmatpush2.bf16.msra.mxu0 0
        %1303 = vmatprep.subr.bf16.mxu0 0
        %1304 = vmatpush2.bf16.msra.mxu0 0
        %1305 = vmatprep.subr.bf16.mxu0 0
        %1306 = vmatpush2.bf16.msra.mxu0 0
        %1307 = vmatprep.subr.bf16.mxu0 0
        %1308 = vmatpush2.bf16.msra.mxu0 0
        %1309 = vmatprep.subr.bf16.mxu0 0
        %1310 = vmatpush2.bf16.msra.mxu0 0
        %1311 = vmatprep.subr.bf16.mxu0 0
        %1312 = vmatpush2.bf16.msra.mxu0 0
        %1313 = vmatprep.subr.bf16.mxu0 0
        %1314 = vmatpush2.bf16.msra.mxu0 0
        %1315 = vmatprep.subr.bf16.mxu0 0
        %1316 = vmatpush2.bf16.msra.mxu0 0
        %1317 = vmatprep.mubr.bf16.mxu0 0
        %1318 = vmatmul.mubr.bf16.gmra.mxu0 %v1280
        %v1319 = vpop.f32.mrf.mxu0
        %v1320 = vadd.f32 0.0, %v1319
        %v1321 = vpop.f32.mrf.mxu0
        %v1322 = vpop.f32.mrf.mxu0
        %v1323 = vpop.f32.mrf.mxu0
        %1324 = vdwg.mxu0
        %v1325 = vpack.c.bf16 %v1320, %v1271
        %v1326 = vld [vmem:[%s529 + $0x4] sm:$0xf]
        %v1328 = vsel %vm879, %v1325, 0
        %v1331 = vsel %vm1003, %v1326, 0
        %1333 = vmatprep.subr.bf16.mxu0 0
        %1334 = vmatpush1.bf16.msra.mxu0 0
        %1335 = vmatprep.subr.bf16.mxu0 0
        %1336 = vmatpush1.bf16.msra.mxu0 0
        %1337 = vmatprep.subr.bf16.mxu0 0
        %1338 = vmatpush1.bf16.msra.mxu0 0
        %1339 = vmatprep.subr.bf16.mxu0 0
        %1340 = vmatpush1.bf16.msra.mxu0 0
        %1341 = vmatprep.subr.bf16.mxu0 0
        %1342 = vmatpush1.bf16.msra.mxu0 0
        %1343 = vmatprep.subr.bf16.mxu0 0
        %1344 = vmatpush1.bf16.msra.mxu0 0
        %1345 = vmatprep.subr.bf16.mxu0 0
        %1346 = vmatpush1.bf16.msra.mxu0 0
        %1347 = vmatprep.subr.bf16.mxu0 0
        %1348 = vmatpush1.bf16.msra.mxu0 %v1331
        %1349 = vmatprep.subr.bf16.mxu0 0
        %1350 = vmatpush2.bf16.msra.mxu0 0
        %1351 = vmatprep.subr.bf16.mxu0 0
        %1352 = vmatpush2.bf16.msra.mxu0 0
        %1353 = vmatprep.subr.bf16.mxu0 0
        %1354 = vmatpush2.bf16.msra.mxu0 0
        %1355 = vmatprep.subr.bf16.mxu0 0
        %1356 = vmatpush2.bf16.msra.mxu0 0
        %1357 = vmatprep.subr.bf16.mxu0 0
        %1358 = vmatpush2.bf16.msra.mxu0 0
        %1359 = vmatprep.subr.bf16.mxu0 0
        %1360 = vmatpush2.bf16.msra.mxu0 0
        %1361 = vmatprep.subr.bf16.mxu0 0
        %1362 = vmatpush2.bf16.msra.mxu0 0
        %1363 = vmatprep.subr.bf16.mxu0 0
        %1364 = vmatpush2.bf16.msra.mxu0 0
        %1365 = vmatprep.mubr.bf16.mxu0 0
        %1366 = vmatmul.mubr.bf16.gmra.mxu0 %v1328
        %v1367 = vpop.f32.mrf.mxu0
        %v1368 = vadd.f32 0.0, %v1367
        %v1369 = vpop.f32.mrf.mxu0
        %v1370 = vpop.f32.mrf.mxu0
        %v1371 = vadd.f32 0.0, %v1370
        %v1372 = vpop.f32.mrf.mxu0
        %1373 = vdwg.mxu0
        %v1375 = vsel %vm879, %v1093, 0
        %v1378 = vsel %vm1003, %v1094, 0
        %1380 = vmatprep.subr.bf16.mxu0 0
        %1381 = vmatpush1.bf16.msra.mxu0 0
        %1382 = vmatprep.subr.bf16.mxu0 0
        %1383 = vmatpush1.bf16.msra.mxu0 0
        %1384 = vmatprep.subr.bf16.mxu0 0
        %1385 = vmatpush1.bf16.msra.mxu0 0
        %1386 = vmatprep.subr.bf16.mxu0 0
        %1387 = vmatpush1.bf16.msra.mxu0 0
        %1388 = vmatprep.subr.bf16.mxu0 0
        %1389 = vmatpush1.bf16.msra.mxu0 0
        %1390 = vmatprep.subr.bf16.mxu0 0
        %1391 = vmatpush1.bf16.msra.mxu0 0
        %1392 = vmatprep.subr.bf16.mxu0 0
        %1393 = vmatpush1.bf16.msra.mxu0 0
        %1394 = vmatprep.subr.bf16.mxu0 0
        %1395 = vmatpush1.bf16.msra.mxu0 %v1378
        %1396 = vmatprep.subr.bf16.mxu0 0
        %1397 = vmatpush2.bf16.msra.mxu0 0
        %1398 = vmatprep.subr.bf16.mxu0 0
        %1399 = vmatpush2.bf16.msra.mxu0 0
        %1400 = vmatprep.subr.bf16.mxu0 0
        %1401 = vmatpush2.bf16.msra.mxu0 0
        %1402 = vmatprep.subr.bf16.mxu0 0
        %1403 = vmatpush2.bf16.msra.mxu0 0
        %1404 = vmatprep.subr.bf16.mxu0 0
        %1405 = vmatpush2.bf16.msra.mxu0 0
        %1406 = vmatprep.subr.bf16.mxu0 0
        %1407 = vmatpush2.bf16.msra.mxu0 0
        %1408 = vmatprep.subr.bf16.mxu0 0
        %1409 = vmatpush2.bf16.msra.mxu0 0
        %1410 = vmatprep.subr.bf16.mxu0 0
        %1411 = vmatpush2.bf16.msra.mxu0 0
        %1412 = vmatprep.mubr.bf16.mxu0 0
        %1413 = vmatmul.mubr.bf16.gmra.mxu0 %v1375
        %v1414 = vpop.f32.mrf.mxu0
        %v1415 = vadd.f32 %v1368, %v1414
        %v1416 = vpop.f32.mrf.mxu0
        %v1417 = vpop.f32.mrf.mxu0
        %v1418 = vadd.f32 %v1371, %v1417
        %v1419 = vpop.f32.mrf.mxu0
        %1420 = vdwg.mxu0
        %1421 = vrot.lane.b32.xlu0 %v873, 112
        %v1422 = vpop.permute.xlu0 %1421
        %1423 = vrot.lane.b32.xlu0 %v875, 112
        %v1424 = vpop.permute.xlu0 %1423
        %v1426 = vsel %vm879, %v1422, 0
        %v1429 = vsel %vm879, %v1424, 0
        %1431 = vmatprep.subr.bf16.mxu0 0
        %1432 = vmatpush1.bf16.xpose.msra.mxu0 0
        %1433 = vmatprep.subr.bf16.mxu0 0
        %1434 = vmatpush1.bf16.xpose.msra.mxu0 0
        %1435 = vmatprep.subr.bf16.mxu0 0
        %1436 = vmatpush1.bf16.xpose.msra.mxu0 0
        %1437 = vmatprep.subr.bf16.mxu0 0
        %1438 = vmatpush1.bf16.xpose.msra.mxu0 0
        %1439 = vmatprep.subr.bf16.mxu0 0
        %1440 = vmatpush1.bf16.xpose.msra.mxu0 0
        %1441 = vmatprep.subr.bf16.mxu0 0
        %1442 = vmatpush1.bf16.xpose.msra.mxu0 0
        %1443 = vmatprep.subr.bf16.mxu0 0
        %1444 = vmatpush1.bf16.xpose.msra.mxu0 0
        %1445 = vmatprep.subr.bf16.mxu0 0
        %1446 = vmatpush1.bf16.xpose.msra.mxu0 %v1429
        %1447 = vmatprep.subr.bf16.mxu0 0
        %1448 = vmatpush2.bf16.xpose.msra.mxu0 0
        %1449 = vmatprep.subr.bf16.mxu0 0
        %1450 = vmatpush2.bf16.xpose.msra.mxu0 0
        %1451 = vmatprep.subr.bf16.mxu0 0
        %1452 = vmatpush2.bf16.xpose.msra.mxu0 0
        %1453 = vmatprep.subr.bf16.mxu0 0
        %1454 = vmatpush2.bf16.xpose.msra.mxu0 0
        %1455 = vmatprep.subr.bf16.mxu0 0
        %1456 = vmatpush2.bf16.xpose.msra.mxu0 0
        %1457 = vmatprep.subr.bf16.mxu0 0
        %1458 = vmatpush2.bf16.xpose.msra.mxu0 0
        %1459 = vmatprep.subr.bf16.mxu0 0
        %1460 = vmatpush2.bf16.xpose.msra.mxu0 0
        %1461 = vmatprep.subr.bf16.mxu0 0
        %1462 = vmatpush2.bf16.xpose.msra.mxu0 0
        %1463 = vmatprep.mubr.bf16.mxu0 0
        %1464 = vmatmul.mubr.bf16.gmra.mxu0 %v1426
        %v1465 = vpop.f32.mrf.mxu0
        %v1466 = vadd.f32 0.0, %v1465
        %v1467 = vpop.f32.mrf.mxu0
        %v1468 = vpop.f32.mrf.mxu0
        %v1469 = vpop.f32.mrf.mxu0
        %1470 = vdwg.mxu0
        %1471 = vrot.lane.b32.xlu0 %v874, 112
        %v1472 = vpop.permute.xlu0 %1471
        %1473 = vrot.lane.b32.xlu0 %v876, 112
        %v1474 = vpop.permute.xlu0 %1473
        %v1476 = vsel %vm879, %v1472, 0
        %v1479 = vsel %vm879, %v1474, 0
        %1481 = vmatprep.subr.bf16.mxu0 0
        %1482 = vmatpush1.bf16.xpose.msra.mxu0 0
        %1483 = vmatprep.subr.bf16.mxu0 0
        %1484 = vmatpush1.bf16.xpose.msra.mxu0 0
        %1485 = vmatprep.subr.bf16.mxu0 0
        %1486 = vmatpush1.bf16.xpose.msra.mxu0 0
        %1487 = vmatprep.subr.bf16.mxu0 0
        %1488 = vmatpush1.bf16.xpose.msra.mxu0 0
        %1489 = vmatprep.subr.bf16.mxu0 0
        %1490 = vmatpush1.bf16.xpose.msra.mxu0 0
        %1491 = vmatprep.subr.bf16.mxu0 0
        %1492 = vmatpush1.bf16.xpose.msra.mxu0 0
        %1493 = vmatprep.subr.bf16.mxu0 0
        %1494 = vmatpush1.bf16.xpose.msra.mxu0 0
        %1495 = vmatprep.subr.bf16.mxu0 0
        %1496 = vmatpush1.bf16.xpose.msra.mxu0 %v1479
        %1497 = vmatprep.subr.bf16.mxu0 0
        %1498 = vmatpush2.bf16.xpose.msra.mxu0 0
        %1499 = vmatprep.subr.bf16.mxu0 0
        %1500 = vmatpush2.bf16.xpose.msra.mxu0 0
        %1501 = vmatprep.subr.bf16.mxu0 0
        %1502 = vmatpush2.bf16.xpose.msra.mxu0 0
        %1503 = vmatprep.subr.bf16.mxu0 0
        %1504 = vmatpush2.bf16.xpose.msra.mxu0 0
        %1505 = vmatprep.subr.bf16.mxu0 0
        %1506 = vmatpush2.bf16.xpose.msra.mxu0 0
        %1507 = vmatprep.subr.bf16.mxu0 0
        %1508 = vmatpush2.bf16.xpose.msra.mxu0 0
        %1509 = vmatprep.subr.bf16.mxu0 0
        %1510 = vmatpush2.bf16.xpose.msra.mxu0 0
        %1511 = vmatprep.subr.bf16.mxu0 0
        %1512 = vmatpush2.bf16.xpose.msra.mxu0 0
        %1513 = vmatprep.mubr.bf16.mxu0 0
        %1514 = vmatmul.mubr.bf16.gmra.mxu0 %v1476
        %v1515 = vpop.f32.mrf.mxu0
        %v1516 = vadd.f32 0.0, %v1515
        %v1517 = vpop.f32.mrf.mxu0
        %v1518 = vpop.f32.mrf.mxu0
        %v1519 = vpop.f32.mrf.mxu0
        %1520 = vdwg.mxu0
        %v1521 = vmul.f32 %v1466, 0.35355338
        %v1522 = vmul.f32 %v1516, 0.35355338
        %v1523 = vsel %vm872, %v1521, -3.4028235e+38
        %v1524 = vsel %vm872, %v1522, -3.4028235e+38
        %v1525 = vsel %vm879, %v1523, -inf
        %1526 = vmax.xlane.f32.xlu0 %v1525
        %v1527 = vpop.xlane.xlu0 %1526
        %v1528 = vsel %vm879, %v1524, -inf
        %1529 = vmax.xlane.f32.xlu0 %v1528
        %v1530 = vpop.xlane.xlu0 %1529
        %v1531 = vsub.f32 %v1523, %v1527
        %v1532 = vsub.f32 %v1524, %v1530
        %v1533 = vmul.f32 %v1531, 1.442695
        %v1534 = vpow.pop %v1533
        %v1535 = vmul.f32 %v1532, 1.442695
        %v1536 = vpow.pop %v1535
        %v1537 = vsel %vm879, %v1534, 0.0
        %1538 = vadd.xlane.f32.xlu0 %v1537
        %v1539 = vpop.xlane.xlu0 %1538
        %v1540 = vsel %vm879, %v1536, 0.0
        %1541 = vadd.xlane.f32.xlu0 %v1540
        %v1542 = vpop.xlane.xlu0 %1541
        %v1543 = vrcp.pop %v1539
        %v1544 = vrcp.pop %v1542
        %v1545 = vmul.f32 %v1534, %v1543
        %v1546 = vmul.f32 %v1536, %v1544
        %v1547 = vpack.c.bf16 %v1545, %v1545
        %v1548 = vpack.c.bf16 %v1546, %v1546
        %1549 = vrot.lane.b32.xlu0 %v877, 112
        %v1550 = vpop.permute.xlu0 %1549
        %v1552 = vsel %vm879, %v1547, 0
        %v1555 = vsel %vm1003, %v1550, 0
        %1557 = vmatprep.subr.bf16.mxu0 0
        %1558 = vmatpush1.bf16.msra.mxu0 0
        %1559 = vmatprep.subr.bf16.mxu0 0
        %1560 = vmatpush1.bf16.msra.mxu0 0
        %1561 = vmatprep.subr.bf16.mxu0 0
        %1562 = vmatpush1.bf16.msra.mxu0 0
        %1563 = vmatprep.subr.bf16.mxu0 0
        %1564 = vmatpush1.bf16.msra.mxu0 0
        %1565 = vmatprep.subr.bf16.mxu0 0
        %1566 = vmatpush1.bf16.msra.mxu0 0
        %1567 = vmatprep.subr.bf16.mxu0 0
        %1568 = vmatpush1.bf16.msra.mxu0 0
        %1569 = vmatprep.subr.bf16.mxu0 0
        %1570 = vmatpush1.bf16.msra.mxu0 0
        %1571 = vmatprep.subr.bf16.mxu0 0
        %1572 = vmatpush1.bf16.msra.mxu0 %v1555
        %1573 = vmatprep.subr.bf16.mxu0 0
        %1574 = vmatpush2.bf16.msra.mxu0 0
        %1575 = vmatprep.subr.bf16.mxu0 0
        %1576 = vmatpush2.bf16.msra.mxu0 0
        %1577 = vmatprep.subr.bf16.mxu0 0
        %1578 = vmatpush2.bf16.msra.mxu0 0
        %1579 = vmatprep.subr.bf16.mxu0 0
        %1580 = vmatpush2.bf16.msra.mxu0 0
        %1581 = vmatprep.subr.bf16.mxu0 0
        %1582 = vmatpush2.bf16.msra.mxu0 0
        %1583 = vmatprep.subr.bf16.mxu0 0
        %1584 = vmatpush2.bf16.msra.mxu0 0
        %1585 = vmatprep.subr.bf16.mxu0 0
        %1586 = vmatpush2.bf16.msra.mxu0 0
        %1587 = vmatprep.subr.bf16.mxu0 0
        %1588 = vmatpush2.bf16.msra.mxu0 0
        %1589 = vmatprep.mubr.bf16.mxu0 0
        %1590 = vmatmul.mubr.bf16.gmra.mxu0 %v1552
        %v1591 = vpop.f32.mrf.mxu0
        %v1592 = vadd.f32 0.0, %v1591
        %v1593 = vpop.f32.mrf.mxu0
        %v1594 = vpop.f32.mrf.mxu0
        %v1595 = vpop.f32.mrf.mxu0
        %1596 = vdwg.mxu0
        %1597 = vrot.lane.b32.xlu0 %v878, 112
        %v1598 = vpop.permute.xlu0 %1597
        %v1600 = vsel %vm879, %v1548, 0
        %v1603 = vsel %vm1003, %v1598, 0
        %1605 = vmatprep.subr.bf16.mxu0 0
        %1606 = vmatpush1.bf16.msra.mxu0 0
        %1607 = vmatprep.subr.bf16.mxu0 0
        %1608 = vmatpush1.bf16.msra.mxu0 0
        %1609 = vmatprep.subr.bf16.mxu0 0
        %1610 = vmatpush1.bf16.msra.mxu0 0
        %1611 = vmatprep.subr.bf16.mxu0 0
        %1612 = vmatpush1.bf16.msra.mxu0 0
        %1613 = vmatprep.subr.bf16.mxu0 0
        %1614 = vmatpush1.bf16.msra.mxu0 0
        %1615 = vmatprep.subr.bf16.mxu0 0
        %1616 = vmatpush1.bf16.msra.mxu0 0
        %1617 = vmatprep.subr.bf16.mxu0 0
        %1618 = vmatpush1.bf16.msra.mxu0 0
        %1619 = vmatprep.subr.bf16.mxu0 0
        %1620 = vmatpush1.bf16.msra.mxu0 %v1603
        %1621 = vmatprep.subr.bf16.mxu0 0
        %1622 = vmatpush2.bf16.msra.mxu0 0
        %1623 = vmatprep.subr.bf16.mxu0 0
        %1624 = vmatpush2.bf16.msra.mxu0 0
        %1625 = vmatprep.subr.bf16.mxu0 0
        %1626 = vmatpush2.bf16.msra.mxu0 0
        %1627 = vmatprep.subr.bf16.mxu0 0
        %1628 = vmatpush2.bf16.msra.mxu0 0
        %1629 = vmatprep.subr.bf16.mxu0 0
        %1630 = vmatpush2.bf16.msra.mxu0 0
        %1631 = vmatprep.subr.bf16.mxu0 0
        %1632 = vmatpush2.bf16.msra.mxu0 0
        %1633 = vmatprep.subr.bf16.mxu0 0
        %1634 = vmatpush2.bf16.msra.mxu0 0
        %1635 = vmatprep.subr.bf16.mxu0 0
        %1636 = vmatpush2.bf16.msra.mxu0 0
        %1637 = vmatprep.mubr.bf16.mxu0 0
        %1638 = vmatmul.mubr.bf16.gmra.mxu0 %v1600
        %v1639 = vpop.f32.mrf.mxu0
        %v1640 = vadd.f32 0.0, %v1639
        %v1641 = vpop.f32.mrf.mxu0
        %v1642 = vpop.f32.mrf.mxu0
        %v1643 = vpop.f32.mrf.mxu0
        %1644 = vdwg.mxu0
        %v1645 = vpack.c.bf16 %v1640, %v1592
        %v1646 = vld [vmem:[%s529 + $0x8] sm:$0xf]
        %v1648 = vsel %vm879, %v1645, 0
        %v1651 = vsel %vm1003, %v1646, 0
        %1653 = vmatprep.subr.bf16.mxu0 0
        %1654 = vmatpush1.bf16.msra.mxu0 0
        %1655 = vmatprep.subr.bf16.mxu0 0
        %1656 = vmatpush1.bf16.msra.mxu0 0
        %1657 = vmatprep.subr.bf16.mxu0 0
        %1658 = vmatpush1.bf16.msra.mxu0 0
        %1659 = vmatprep.subr.bf16.mxu0 0
        %1660 = vmatpush1.bf16.msra.mxu0 0
        %1661 = vmatprep.subr.bf16.mxu0 0
        %1662 = vmatpush1.bf16.msra.mxu0 0
        %1663 = vmatprep.subr.bf16.mxu0 0
        %1664 = vmatpush1.bf16.msra.mxu0 0
        %1665 = vmatprep.subr.bf16.mxu0 0
        %1666 = vmatpush1.bf16.msra.mxu0 0
        %1667 = vmatprep.subr.bf16.mxu0 0
        %1668 = vmatpush1.bf16.msra.mxu0 %v1651
        %1669 = vmatprep.subr.bf16.mxu0 0
        %1670 = vmatpush2.bf16.msra.mxu0 0
        %1671 = vmatprep.subr.bf16.mxu0 0
        %1672 = vmatpush2.bf16.msra.mxu0 0
        %1673 = vmatprep.subr.bf16.mxu0 0
        %1674 = vmatpush2.bf16.msra.mxu0 0
        %1675 = vmatprep.subr.bf16.mxu0 0
        %1676 = vmatpush2.bf16.msra.mxu0 0
        %1677 = vmatprep.subr.bf16.mxu0 0
        %1678 = vmatpush2.bf16.msra.mxu0 0
        %1679 = vmatprep.subr.bf16.mxu0 0
        %1680 = vmatpush2.bf16.msra.mxu0 0
        %1681 = vmatprep.subr.bf16.mxu0 0
        %1682 = vmatpush2.bf16.msra.mxu0 0
        %1683 = vmatprep.subr.bf16.mxu0 0
        %1684 = vmatpush2.bf16.msra.mxu0 0
        %1685 = vmatprep.mubr.bf16.mxu0 0
        %1686 = vmatmul.mubr.bf16.gmra.mxu0 %v1648
        %v1687 = vpop.f32.mrf.mxu0
        %v1688 = vadd.f32 0.0, %v1687
        %v1689 = vpop.f32.mrf.mxu0
        %v1690 = vpop.f32.mrf.mxu0
        %v1691 = vadd.f32 0.0, %v1690
        %v1692 = vpop.f32.mrf.mxu0
        %1693 = vdwg.mxu0
        %v1694 = vadd.f32 %v1415, %v1688
        %v1695 = vadd.f32 %v1418, %v1691
        %1696 = vrot.lane.b32.xlu0 %v873, 104
        %v1697 = vpop.permute.xlu0 %1696
        %1698 = vrot.lane.b32.xlu0 %v875, 104
        %v1699 = vpop.permute.xlu0 %1698
        %v1701 = vsel %vm879, %v1697, 0
        %v1704 = vsel %vm879, %v1699, 0
        %1706 = vmatprep.subr.bf16.mxu0 0
        %1707 = vmatpush1.bf16.xpose.msra.mxu0 0
        %1708 = vmatprep.subr.bf16.mxu0 0
        %1709 = vmatpush1.bf16.xpose.msra.mxu0 0
        %1710 = vmatprep.subr.bf16.mxu0 0
        %1711 = vmatpush1.bf16.xpose.msra.mxu0 0
        %1712 = vmatprep.subr.bf16.mxu0 0
        %1713 = vmatpush1.bf16.xpose.msra.mxu0 0
        %1714 = vmatprep.subr.bf16.mxu0 0
        %1715 = vmatpush1.bf16.xpose.msra.mxu0 0
        %1716 = vmatprep.subr.bf16.mxu0 0
        %1717 = vmatpush1.bf16.xpose.msra.mxu0 0
        %1718 = vmatprep.subr.bf16.mxu0 0
        %1719 = vmatpush1.bf16.xpose.msra.mxu0 0
        %1720 = vmatprep.subr.bf16.mxu0 0
        %1721 = vmatpush1.bf16.xpose.msra.mxu0 %v1704
        %1722 = vmatprep.subr.bf16.mxu0 0
        %1723 = vmatpush2.bf16.xpose.msra.mxu0 0
        %1724 = vmatprep.subr.bf16.mxu0 0
        %1725 = vmatpush2.bf16.xpose.msra.mxu0 0
        %1726 = vmatprep.subr.bf16.mxu0 0
        %1727 = vmatpush2.bf16.xpose.msra.mxu0 0
        %1728 = vmatprep.subr.bf16.mxu0 0
        %1729 = vmatpush2.bf16.xpose.msra.mxu0 0
        %1730 = vmatprep.subr.bf16.mxu0 0
        %1731 = vmatpush2.bf16.xpose.msra.mxu0 0
        %1732 = vmatprep.subr.bf16.mxu0 0
        %1733 = vmatpush2.bf16.xpose.msra.mxu0 0
        %1734 = vmatprep.subr.bf16.mxu0 0
        %1735 = vmatpush2.bf16.xpose.msra.mxu0 0
        %1736 = vmatprep.subr.bf16.mxu0 0
        %1737 = vmatpush2.bf16.xpose.msra.mxu0 0
        %1738 = vmatprep.mubr.bf16.mxu0 0
        %1739 = vmatmul.mubr.bf16.gmra.mxu0 %v1701
        %v1740 = vpop.f32.mrf.mxu0
        %v1741 = vadd.f32 0.0, %v1740
        %v1742 = vpop.f32.mrf.mxu0
        %v1743 = vpop.f32.mrf.mxu0
        %v1744 = vpop.f32.mrf.mxu0
        %1745 = vdwg.mxu0
        %1746 = vrot.lane.b32.xlu0 %v874, 104
        %v1747 = vpop.permute.xlu0 %1746
        %1748 = vrot.lane.b32.xlu0 %v876, 104
        %v1749 = vpop.permute.xlu0 %1748
        %v1751 = vsel %vm879, %v1747, 0
        %v1754 = vsel %vm879, %v1749, 0
        %1756 = vmatprep.subr.bf16.mxu0 0
        %1757 = vmatpush1.bf16.xpose.msra.mxu0 0
        %1758 = vmatprep.subr.bf16.mxu0 0
        %1759 = vmatpush1.bf16.xpose.msra.mxu0 0
        %1760 = vmatprep.subr.bf16.mxu0 0
        %1761 = vmatpush1.bf16.xpose.msra.mxu0 0
        %1762 = vmatprep.subr.bf16.mxu0 0
        %1763 = vmatpush1.bf16.xpose.msra.mxu0 0
        %1764 = vmatprep.subr.bf16.mxu0 0
        %1765 = vmatpush1.bf16.xpose.msra.mxu0 0
        %1766 = vmatprep.subr.bf16.mxu0 0
        %1767 = vmatpush1.bf16.xpose.msra.mxu0 0
        %1768 = vmatprep.subr.bf16.mxu0 0
        %1769 = vmatpush1.bf16.xpose.msra.mxu0 0
        %1770 = vmatprep.subr.bf16.mxu0 0
        %1771 = vmatpush1.bf16.xpose.msra.mxu0 %v1754
        %1772 = vmatprep.subr.bf16.mxu0 0
        %1773 = vmatpush2.bf16.xpose.msra.mxu0 0
        %1774 = vmatprep.subr.bf16.mxu0 0
        %1775 = vmatpush2.bf16.xpose.msra.mxu0 0
        %1776 = vmatprep.subr.bf16.mxu0 0
        %1777 = vmatpush2.bf16.xpose.msra.mxu0 0
        %1778 = vmatprep.subr.bf16.mxu0 0
        %1779 = vmatpush2.bf16.xpose.msra.mxu0 0
        %1780 = vmatprep.subr.bf16.mxu0 0
        %1781 = vmatpush2.bf16.xpose.msra.mxu0 0
        %1782 = vmatprep.subr.bf16.mxu0 0
        %1783 = vmatpush2.bf16.xpose.msra.mxu0 0
        %1784 = vmatprep.subr.bf16.mxu0 0
        %1785 = vmatpush2.bf16.xpose.msra.mxu0 0
        %1786 = vmatprep.subr.bf16.mxu0 0
        %1787 = vmatpush2.bf16.xpose.msra.mxu0 0
        %1788 = vmatprep.mubr.bf16.mxu0 0
        %1789 = vmatmul.mubr.bf16.gmra.mxu0 %v1751
        %v1790 = vpop.f32.mrf.mxu0
        %v1791 = vadd.f32 0.0, %v1790
        %v1792 = vpop.f32.mrf.mxu0
        %v1793 = vpop.f32.mrf.mxu0
        %v1794 = vpop.f32.mrf.mxu0
        %1795 = vdwg.mxu0
        %v1796 = vmul.f32 %v1741, 0.35355338
        %v1797 = vmul.f32 %v1791, 0.35355338
        %v1798 = vsel %vm872, %v1796, -3.4028235e+38
        %v1799 = vsel %vm872, %v1797, -3.4028235e+38
        %v1800 = vsel %vm879, %v1798, -inf
        %1801 = vmax.xlane.f32.xlu0 %v1800
        %v1802 = vpop.xlane.xlu0 %1801
        %v1803 = vsel %vm879, %v1799, -inf
        %1804 = vmax.xlane.f32.xlu0 %v1803
        %v1805 = vpop.xlane.xlu0 %1804
        %v1806 = vsub.f32 %v1798, %v1802
        %v1807 = vsub.f32 %v1799, %v1805
        %v1808 = vmul.f32 %v1806, 1.442695
        %v1809 = vpow.pop %v1808
        %v1810 = vmul.f32 %v1807, 1.442695
        %v1811 = vpow.pop %v1810
        %v1812 = vsel %vm879, %v1809, 0.0
        %1813 = vadd.xlane.f32.xlu0 %v1812
        %v1814 = vpop.xlane.xlu0 %1813
        %v1815 = vsel %vm879, %v1811, 0.0
        %1816 = vadd.xlane.f32.xlu0 %v1815
        %v1817 = vpop.xlane.xlu0 %1816
        %v1818 = vrcp.pop %v1814
        %v1819 = vrcp.pop %v1817
        %v1820 = vmul.f32 %v1809, %v1818
        %v1821 = vmul.f32 %v1811, %v1819
        %v1822 = vpack.c.bf16 %v1820, %v1820
        %v1823 = vpack.c.bf16 %v1821, %v1821
        %1824 = vrot.lane.b32.xlu0 %v877, 104
        %v1825 = vpop.permute.xlu0 %1824
        %v1827 = vsel %vm879, %v1822, 0
        %v1830 = vsel %vm1003, %v1825, 0
        %1832 = vmatprep.subr.bf16.mxu0 0
        %1833 = vmatpush1.bf16.msra.mxu0 0
        %1834 = vmatprep.subr.bf16.mxu0 0
        %1835 = vmatpush1.bf16.msra.mxu0 0
        %1836 = vmatprep.subr.bf16.mxu0 0
        %1837 = vmatpush1.bf16.msra.mxu0 0
        %1838 = vmatprep.subr.bf16.mxu0 0
        %1839 = vmatpush1.bf16.msra.mxu0 0
        %1840 = vmatprep.subr.bf16.mxu0 0
        %1841 = vmatpush1.bf16.msra.mxu0 0
        %1842 = vmatprep.subr.bf16.mxu0 0
        %1843 = vmatpush1.bf16.msra.mxu0 0
        %1844 = vmatprep.subr.bf16.mxu0 0
        %1845 = vmatpush1.bf16.msra.mxu0 0
        %1846 = vmatprep.subr.bf16.mxu0 0
        %1847 = vmatpush1.bf16.msra.mxu0 %v1830
        %1848 = vmatprep.subr.bf16.mxu0 0
        %1849 = vmatpush2.bf16.msra.mxu0 0
        %1850 = vmatprep.subr.bf16.mxu0 0
        %1851 = vmatpush2.bf16.msra.mxu0 0
        %1852 = vmatprep.subr.bf16.mxu0 0
        %1853 = vmatpush2.bf16.msra.mxu0 0
        %1854 = vmatprep.subr.bf16.mxu0 0
        %1855 = vmatpush2.bf16.msra.mxu0 0
        %1856 = vmatprep.subr.bf16.mxu0 0
        %1857 = vmatpush2.bf16.msra.mxu0 0
        %1858 = vmatprep.subr.bf16.mxu0 0
        %1859 = vmatpush2.bf16.msra.mxu0 0
        %1860 = vmatprep.subr.bf16.mxu0 0
        %1861 = vmatpush2.bf16.msra.mxu0 0
        %1862 = vmatprep.subr.bf16.mxu0 0
        %1863 = vmatpush2.bf16.msra.mxu0 0
        %1864 = vmatprep.mubr.bf16.mxu0 0
        %1865 = vmatmul.mubr.bf16.gmra.mxu0 %v1827
        %v1866 = vpop.f32.mrf.mxu0
        %v1867 = vadd.f32 0.0, %v1866
        %v1868 = vpop.f32.mrf.mxu0
        %v1869 = vpop.f32.mrf.mxu0
        %v1870 = vpop.f32.mrf.mxu0
        %1871 = vdwg.mxu0
        %1872 = vrot.lane.b32.xlu0 %v878, 104
        %v1873 = vpop.permute.xlu0 %1872
        %v1875 = vsel %vm879, %v1823, 0
        %v1878 = vsel %vm1003, %v1873, 0
        %1880 = vmatprep.subr.bf16.mxu0 0
        %1881 = vmatpush1.bf16.msra.mxu0 0
        %1882 = vmatprep.subr.bf16.mxu0 0
        %1883 = vmatpush1.bf16.msra.mxu0 0
        %1884 = vmatprep.subr.bf16.mxu0 0
        %1885 = vmatpush1.bf16.msra.mxu0 0
        %1886 = vmatprep.subr.bf16.mxu0 0
        %1887 = vmatpush1.bf16.msra.mxu0 0
        %1888 = vmatprep.subr.bf16.mxu0 0
        %1889 = vmatpush1.bf16.msra.mxu0 0
        %1890 = vmatprep.subr.bf16.mxu0 0
        %1891 = vmatpush1.bf16.msra.mxu0 0
        %1892 = vmatprep.subr.bf16.mxu0 0
        %1893 = vmatpush1.bf16.msra.mxu0 0
        %1894 = vmatprep.subr.bf16.mxu0 0
        %1895 = vmatpush1.bf16.msra.mxu0 %v1878
        %1896 = vmatprep.subr.bf16.mxu0 0
        %1897 = vmatpush2.bf16.msra.mxu0 0
        %1898 = vmatprep.subr.bf16.mxu0 0
        %1899 = vmatpush2.bf16.msra.mxu0 0
        %1900 = vmatprep.subr.bf16.mxu0 0
        %1901 = vmatpush2.bf16.msra.mxu0 0
        %1902 = vmatprep.subr.bf16.mxu0 0
        %1903 = vmatpush2.bf16.msra.mxu0 0
        %1904 = vmatprep.subr.bf16.mxu0 0
        %1905 = vmatpush2.bf16.msra.mxu0 0
        %1906 = vmatprep.subr.bf16.mxu0 0
        %1907 = vmatpush2.bf16.msra.mxu0 0
        %1908 = vmatprep.subr.bf16.mxu0 0
        %1909 = vmatpush2.bf16.msra.mxu0 0
        %1910 = vmatprep.subr.bf16.mxu0 0
        %1911 = vmatpush2.bf16.msra.mxu0 0
        %1912 = vmatprep.mubr.bf16.mxu0 0
        %1913 = vmatmul.mubr.bf16.gmra.mxu0 %v1875
        %v1914 = vpop.f32.mrf.mxu0
        %v1915 = vadd.f32 0.0, %v1914
        %v1916 = vpop.f32.mrf.mxu0
        %v1917 = vpop.f32.mrf.mxu0
        %v1918 = vpop.f32.mrf.mxu0
        %1919 = vdwg.mxu0
        %v1920 = vpack.c.bf16 %v1915, %v1867
        %v1921 = vld [vmem:[%s529 + $0xc] sm:$0xf]
        %v1923 = vsel %vm879, %v1920, 0
        %v1926 = vsel %vm1003, %v1921, 0
        %1928 = vmatprep.subr.bf16.mxu0 0
        %1929 = vmatpush1.bf16.msra.mxu0 0
        %1930 = vmatprep.subr.bf16.mxu0 0
        %1931 = vmatpush1.bf16.msra.mxu0 0
        %1932 = vmatprep.subr.bf16.mxu0 0
        %1933 = vmatpush1.bf16.msra.mxu0 0
        %1934 = vmatprep.subr.bf16.mxu0 0
        %1935 = vmatpush1.bf16.msra.mxu0 0
        %1936 = vmatprep.subr.bf16.mxu0 0
        %1937 = vmatpush1.bf16.msra.mxu0 0
        %1938 = vmatprep.subr.bf16.mxu0 0
        %1939 = vmatpush1.bf16.msra.mxu0 0
        %1940 = vmatprep.subr.bf16.mxu0 0
        %1941 = vmatpush1.bf16.msra.mxu0 0
        %1942 = vmatprep.subr.bf16.mxu0 0
        %1943 = vmatpush1.bf16.msra.mxu0 %v1926
        %1944 = vmatprep.subr.bf16.mxu0 0
        %1945 = vmatpush2.bf16.msra.mxu0 0
        %1946 = vmatprep.subr.bf16.mxu0 0
        %1947 = vmatpush2.bf16.msra.mxu0 0
        %1948 = vmatprep.subr.bf16.mxu0 0
        %1949 = vmatpush2.bf16.msra.mxu0 0
        %1950 = vmatprep.subr.bf16.mxu0 0
        %1951 = vmatpush2.bf16.msra.mxu0 0
        %1952 = vmatprep.subr.bf16.mxu0 0
        %1953 = vmatpush2.bf16.msra.mxu0 0
        %1954 = vmatprep.subr.bf16.mxu0 0
        %1955 = vmatpush2.bf16.msra.mxu0 0
        %1956 = vmatprep.subr.bf16.mxu0 0
        %1957 = vmatpush2.bf16.msra.mxu0 0
        %1958 = vmatprep.subr.bf16.mxu0 0
        %1959 = vmatpush2.bf16.msra.mxu0 0
        %1960 = vmatprep.mubr.bf16.mxu0 0
        %1961 = vmatmul.mubr.bf16.gmra.mxu0 %v1923
        %v1962 = vpop.f32.mrf.mxu0
        %v1963 = vadd.f32 0.0, %v1962
        %v1964 = vpop.f32.mrf.mxu0
        %v1965 = vpop.f32.mrf.mxu0
        %v1966 = vadd.f32 0.0, %v1965
        %v1967 = vpop.f32.mrf.mxu0
        %1968 = vdwg.mxu0
        %v1969 = vadd.f32 %v1694, %v1963
        %v1970 = vadd.f32 %v1695, %v1966
        %v1971 = vld [vmem:[%s633] sm:$0x1]
        %v1972 = vsel %vm658, %v1969, 0.0
        %1973 = vadd.xlane.f32.xlu0 %v1972
        %v1974 = vpop.xlane.xlu0 %1973
        %v1975 = vsel %vm658, %v1970, 0.0
        %1976 = vadd.xlane.f32.xlu0 %v1975
        %v1977 = vpop.xlane.xlu0 %1976
        %v1978 = vmul.f32 %v1974, %v665
        %v1979 = vmul.f32 %v1977, %v665
        %v1980 = vsub.f32 %v1969, %v1978
        %v1981 = vsub.f32 %v1970, %v1979
        %v1982 = vmul.f32 %v1980, %v1980
        %v1983 = vmul.f32 %v1981, %v1981
        %v1984 = vsel %vm658, %v1982, 0.0
        %1985 = vadd.xlane.f32.xlu0 %v1984
        %v1986 = vpop.xlane.xlu0 %1985
        %v1987 = vsel %vm658, %v1983, 0.0
        %1988 = vadd.xlane.f32.xlu0 %v1987
        %v1989 = vpop.xlane.xlu0 %1988
        %v1990 = vmul.f32 %v1986, %v665
        %v1991 = vmul.f32 %v1989, %v665
        %v1992 = vadd.f32 %v1990, 1e-05
        %v1993 = vadd.f32 %v1991, 1e-05
        %v1994 = vrsqrt.pop %v1992
        %v1995 = vrsqrt.pop %v1993
        %v1996 = vmul.f32 %v1980, %v1994
        %v1997 = vmul.f32 %v1981, %v1995
        %v1999 = vlaneseq
        %v2000 = vshrl.u32 %v1999, 7
        %v2001 = vsub.s32 0, %v2000
        %v2002 = vrot.slane %v1971, %v2001
        %v2004 = vmul.f32 %v1996, %v2002
        %v2005 = vmul.f32 %v1997, %v2002
        %v2006 = vpack.c.bf16 %v2005, %v2004
        %v2007 = vld [vmem:[%s538] sm:$0xf]
        %v2008 = vld [vmem:[%s538 + $0x4] sm:$0xf]
        %v2009 = vld [vmem:[%s538 + $0x8] sm:$0xf]
        %v2010 = vld [vmem:[%s538 + $0xc] sm:$0xf]
        %v2011 = vld [vmem:[%s636] sm:$0x1]
        %v2013 = vlaneseq
        %v2014 = vshrl.u32 %v2013, 7
        %v2015 = vsub.s32 0, %v2014
        %v2016 = vrot.slane %v2011, %v2015
        %v2022 = vunpack.c.l.b16 %v2007
        %v2023 = vunpack.c.l.b16 %v2008
        %v2024 = vunpack.c.l.b16 %v2009
        %v2025 = vunpack.c.l.b16 %v2010
        %v2026 = vpack.c.b16 %v2023, %v2022
        %v2027 = vpack.c.b16 %v2025, %v2024
        %v2031 = vsel %vm658, %v2006, 0
        %2033 = vmatprep.subr.bf16.mxu0 0
        %2034 = vmatpush1.bf16.msra.mxu0 0
        %2035 = vmatprep.subr.bf16.mxu0 0
        %2036 = vmatpush1.bf16.msra.mxu0 0
        %2037 = vmatprep.subr.bf16.mxu0 0
        %2038 = vmatpush1.bf16.msra.mxu0 0
        %2039 = vmatprep.subr.bf16.mxu0 0
        %2040 = vmatpush1.bf16.msra.mxu0 0
        %2041 = vmatprep.subr.bf16.mxu0 0
        %2042 = vmatpush1.bf16.msra.mxu0 0
        %2043 = vmatprep.subr.bf16.mxu0 0
        %2044 = vmatpush1.bf16.msra.mxu0 0
        %2045 = vmatprep.subr.bf16.mxu0 0
        %2046 = vmatpush1.bf16.msra.mxu0 %v2027
        %2047 = vmatprep.subr.bf16.mxu0 0
        %2048 = vmatpush1.bf16.msra.mxu0 %v2026
        %2049 = vmatprep.subr.bf16.mxu0 0
        %2050 = vmatpush2.bf16.msra.mxu0 0
        %2051 = vmatprep.subr.bf16.mxu0 0
        %2052 = vmatpush2.bf16.msra.mxu0 0
        %2053 = vmatprep.subr.bf16.mxu0 0
        %2054 = vmatpush2.bf16.msra.mxu0 0
        %2055 = vmatprep.subr.bf16.mxu0 0
        %2056 = vmatpush2.bf16.msra.mxu0 0
        %2057 = vmatprep.subr.bf16.mxu0 0
        %2058 = vmatpush2.bf16.msra.mxu0 0
        %2059 = vmatprep.subr.bf16.mxu0 0
        %2060 = vmatpush2.bf16.msra.mxu0 0
        %2061 = vmatprep.subr.bf16.mxu0 0
        %2062 = vmatpush2.bf16.msra.mxu0 0
        %2063 = vmatprep.subr.bf16.mxu0 0
        %2064 = vmatpush2.bf16.msra.mxu0 0
        %2065 = vmatprep.mubr.bf16.mxu0 0
        %2066 = vmatmul.mubr.bf16.gmra.mxu0 %v2031
        %v2067 = vpop.f32.mrf.mxu0
        %v2068 = vadd.f32 %v2016, %v2067
        %v2069 = vpop.f32.mrf.mxu0
        %v2070 = vpop.f32.mrf.mxu0
        %v2071 = vadd.f32 %v2016, %v2070
        %v2072 = vpop.f32.mrf.mxu0
        %2073 = vdwg.mxu0
        %v2074 = vmul.f32 %v2068, 0.5
        %v2075 = vmul.f32 %v2071, 0.5
        %v2076 = vmul.f32 %v2068, 0.70710677
        %v2077 = vmul.f32 %v2071, 0.70710677
        %v2078 = verf.f32.pop %v2076
        %v2079 = verf.f32.pop %v2077
        %v2080 = vadd.f32 %v2078, 1.0
        %v2081 = vadd.f32 %v2079, 1.0
        %v2082 = vmul.f32 %v2074, %v2080
        %v2083 = vmul.f32 %v2075, %v2081
        %v2084 = vpack.c.bf16 %v2083, %v2082
        %v2085 = vld [vmem:[%s641] sm:$0xf]
        %v2086 = vld [vmem:[%s641 + $0x4] sm:$0xf]
        %v2087 = vld [vmem:[%s641 + $0x8] sm:$0xf]
        %v2088 = vld [vmem:[%s641 + $0xc] sm:$0xf]
        %v2089 = vld [vmem:[%s641 + $0x10] sm:$0xf]
        %v2090 = vld [vmem:[%s641 + $0x14] sm:$0xf]
        %v2091 = vld [vmem:[%s641 + $0x18] sm:$0xf]
        %v2092 = vld [vmem:[%s641 + $0x1c] sm:$0xf]
        %v2093 = vld [vmem:[%s644] sm:$0x1]
        %v2095 = vlaneseq
        %v2096 = vshrl.u32 %v2095, 7
        %v2097 = vsub.s32 0, %v2096
        %v2098 = vrot.slane %v2093, %v2097
        %v2108 = vunpack.c.l.b16 %v2085
        %v2109 = vunpack.c.l.b16 %v2086
        %v2110 = vunpack.c.l.b16 %v2087
        %v2111 = vunpack.c.l.b16 %v2088
        %v2112 = vunpack.c.l.b16 %v2089
        %v2113 = vunpack.c.l.b16 %v2090
        %v2114 = vunpack.c.l.b16 %v2091
        %v2115 = vunpack.c.l.b16 %v2092
        %v2116 = vpack.c.b16 %v2109, %v2108
        %v2117 = vpack.c.b16 %v2111, %v2110
        %v2118 = vpack.c.b16 %v2113, %v2112
        %v2119 = vpack.c.b16 %v2115, %v2114
        %vm2124 = vcmask 523264
        %v2126 = vsel %vm2124, %v2084, 0
        %2128 = vmatprep.subr.bf16.mxu0 0
        %2129 = vmatpush1.bf16.msra.mxu0 0
        %2130 = vmatprep.subr.bf16.mxu0 0
        %2131 = vmatpush1.bf16.msra.mxu0 0
        %2132 = vmatprep.subr.bf16.mxu0 0
        %2133 = vmatpush1.bf16.msra.mxu0 0
        %2134 = vmatprep.subr.bf16.mxu0 0
        %2135 = vmatpush1.bf16.msra.mxu0 0
        %2136 = vmatprep.subr.bf16.mxu0 0
        %2137 = vmatpush1.bf16.msra.mxu0 %v2119
        %2138 = vmatprep.subr.bf16.mxu0 0
        %2139 = vmatpush1.bf16.msra.mxu0 %v2118
        %2140 = vmatprep.subr.bf16.mxu0 0
        %2141 = vmatpush1.bf16.msra.mxu0 %v2117
        %2142 = vmatprep.subr.bf16.mxu0 0
        %2143 = vmatpush1.bf16.msra.mxu0 %v2116
        %2144 = vmatprep.subr.bf16.mxu0 0
        %2145 = vmatpush2.bf16.msra.mxu0 0
        %2146 = vmatprep.subr.bf16.mxu0 0
        %2147 = vmatpush2.bf16.msra.mxu0 0
        %2148 = vmatprep.subr.bf16.mxu0 0
        %2149 = vmatpush2.bf16.msra.mxu0 0
        %2150 = vmatprep.subr.bf16.mxu0 0
        %2151 = vmatpush2.bf16.msra.mxu0 0
        %2152 = vmatprep.subr.bf16.mxu0 0
        %2153 = vmatpush2.bf16.msra.mxu0 0
        %2154 = vmatprep.subr.bf16.mxu0 0
        %2155 = vmatpush2.bf16.msra.mxu0 0
        %2156 = vmatprep.subr.bf16.mxu0 0
        %2157 = vmatpush2.bf16.msra.mxu0 0
        %2158 = vmatprep.subr.bf16.mxu0 0
        %2159 = vmatpush2.bf16.msra.mxu0 0
        %2160 = vmatprep.mubr.bf16.mxu0 0
        %2161 = vmatmul.mubr.bf16.gmra.mxu0 %v2126
        %v2162 = vpop.f32.mrf.mxu0
        %v2163 = vadd.f32 %v2098, %v2162
        %v2164 = vpop.f32.mrf.mxu0
        %v2165 = vpop.f32.mrf.mxu0
        %v2166 = vadd.f32 %v2098, %v2165
        %v2167 = vpop.f32.mrf.mxu0
        %2168 = vdwg.mxu0
        %2169 = vst.msk [vmem:[#allocation2] sm:$0xff] %vm658, %v2163
        %2170 = vst.msk [vmem:[#allocation2 + $0x8] sm:$0xff] %vm658, %v2166
        %p2171 = scmp.eq.s32.totalorder %s27, 1
        // Predicated region
        $region93: #{tpu_custom_call.1} parent=71 // pred_check
          %p2172 = pneg %p2171
        $region94: #{tpu_custom_call.1} parent=71 // pred_check_branch
          %2174 = sbr.rel (%p2172) target = $region96
        $region95: #{tpu_custom_call.1} parent=71 // pred_region
          %v2175 = vld [vmem:[%s12] sm:$0x1]
          %v2176 = vsel %vm658, %v2163, 0.0
          %2177 = vadd.xlane.f32.xlu0 %v2176
          %v2178 = vpop.xlane.xlu0 %2177
          %v2179 = vsel %vm658, %v2166, 0.0
          %2180 = vadd.xlane.f32.xlu0 %v2179
          %v2181 = vpop.xlane.xlu0 %2180
          %v2182 = vmul.f32 %v2178, %v665
          %v2183 = vmul.f32 %v2181, %v665
          %v2184 = vsub.f32 %v2163, %v2182
          %v2185 = vsub.f32 %v2166, %v2183
          %v2186 = vmul.f32 %v2184, %v2184
          %v2187 = vmul.f32 %v2185, %v2185
          %v2188 = vsel %vm658, %v2186, 0.0
          %2189 = vadd.xlane.f32.xlu0 %v2188
          %v2190 = vpop.xlane.xlu0 %2189
          %v2191 = vsel %vm658, %v2187, 0.0
          %2192 = vadd.xlane.f32.xlu0 %v2191
          %v2193 = vpop.xlane.xlu0 %2192
          %v2194 = vmul.f32 %v2190, %v665
          %v2195 = vmul.f32 %v2193, %v665
          %v2196 = vadd.f32 %v2194, 1e-05
          %v2197 = vadd.f32 %v2195, 1e-05
          %v2198 = vrsqrt.pop %v2196
          %v2199 = vrsqrt.pop %v2197
          %v2200 = vmul.f32 %v2184, %v2198
          %v2201 = vmul.f32 %v2185, %v2199
          %v2203 = vlaneseq
          %v2204 = vshrl.u32 %v2203, 7
          %v2205 = vsub.s32 0, %v2204
          %v2206 = vrot.slane %v2175, %v2205
          %v2208 = vmul.f32 %v2200, %v2206
          %v2209 = vmul.f32 %v2201, %v2206
          %2210 = vst.msk [vmem:[#allocation10] sm:$0xff] %vm658, %v2208
          %2211 = vst.msk [vmem:[#allocation10 + $0x8] sm:$0xff] %vm658, %v2209
        $region96: #{tpu_custom_call.1} parent=71 // pred_fallthru
          _
        // Predicated region
        $region97: #{tpu_custom_call.1} parent=71 // pred_check
          %p2212 = pneg %p363
        $region98: #{tpu_custom_call.1} parent=71 // pred_check_branch
          %2214 = sbr.rel (%p2212) target = $region100
        $region99: #{tpu_custom_call.1} parent=71 // pred_region
          %s2216 = ssub.s32 256, 256
          %2217 = vsyncadd [#allocation5], %s2216
          %s2218 = sshll.u32 [#allocation10], 4
          %s2219 = int_to_ptr.vmem [resolvable:$true] %s2218
          %2224 = dma.vmem_to_hbm [thread:$0]  %s2219, 256, %s13, [#allocation5], 128, 128, 8
        $region100: #{tpu_custom_call.1} parent=71 // pred_fallthru
          _
        // Predicated region
        $region101: #{tpu_custom_call.1} parent=71 // pred_check
          %p2225 = pneg %p363
        $region102: #{tpu_custom_call.1} parent=71 // pred_check_branch
          %2227 = sbr.rel (%p2225) target = $region104
        $region103: #{tpu_custom_call.1} parent=71 // pred_region
          %2228 = dma.done [#allocation5], 256
        $region104: #{tpu_custom_call.1} parent=71 // pred_fallthru
          _
      $region72: #{tpu_custom_call.1} parent=5 // pred_fallthru
        _
      %p2229 = scmp.le.s32.totalorder 2, %s22
      // Predicated region
      $region105: #{tpu_custom_call.1} parent=5 // pred_check
        %p2230 = pneg %p2229
      $region106: #{tpu_custom_call.1} parent=5 // pred_check_branch
        %2232 = sbr.rel (%p2230) target = $region108
      $region107: #{tpu_custom_call.1} parent=5 // pred_region
        %s2233 = ssub.s32 %s22, 2
      $region108: #{tpu_custom_call.1} parent=5 // pred_fallthru
        _
    $region6: #{tpu_custom_call.1} parent=1 // loop_footer
      %s26 = sadd.s32 1, %s22
    $region7: #{tpu_custom_call.1} parent=1 // loop_footer_branch
      %21 = sbr.rel target = $region3
    $region8: #{tpu_custom_call.1} parent=1 // loop_exit
      _
    %2234 = vsyncpa [#allocation4], 1
    %s2235 = scalar_lea.sflag [#allocation4], 1
    %2236 = vsyncpa %s2235, 1
    %2237 = vsyncpa [#allocation7], 1
    %2238 = vsyncpa [#allocation5], 1
    %s2239 = scalar_lea.sflag [#allocation5], 1
    %2240 = vsyncpa %s2239, 1

</llo_original>
